<compile_context>
chip_gen: v7x
topology: tpu7x:2x2x1
jax: 0.10.0
libtpu: 0.0.40
codegen_flags: <defaults>
</compile_context>

<pallas_src>
import functools

import jax
import jax.numpy as jnp
import numpy as np
from jax import lax
from jax.experimental import pallas as pl
from jax.experimental.pallas import tpu as pltpu


# ----------------------------- exact-erf helper (f32 rational approx) -----------------------------
_ERF_ALPHA = (-2.72614225801306e-10, 2.77068142495902e-08, -2.10102402082508e-06,
              -5.69250639462346e-05, -7.34990630326855e-04, -2.95459980854025e-03,
              -1.60960333262415e-02)
_ERF_BETA = (-1.45660718464996e-05, -2.13374055278905e-04, -1.68282697438203e-03,
             -7.37332916720468e-03, -1.42647390514189e-02)


def _erf_f32(x, *, use_pallas_recip=False):
    """erf(x) = x * P(x^2) / Q(x^2), |x| clamped to 4 (XLA/Eigen f32 erf)."""
    x = jnp.clip(x, -4.0, 4.0)
    x2 = x * x
    p = _ERF_ALPHA[0] * x2 + _ERF_ALPHA[1]
    for c in _ERF_ALPHA[2:]:
        p = p * x2 + c
    q = _ERF_BETA[0] * x2 + _ERF_BETA[1]
    for c in _ERF_BETA[2:]:
        q = q * x2 + c
    if use_pallas_recip:
        r = pl.reciprocal(q, approx=True)     # EUP slot (effectively free)
        r = r * (2.0 - q * r)                 # one Newton step -> ~f32 exact
        return (x * p) * r
    return x * p / q


def _gelu_erf(v, *, use_pallas_recip=False):
    # Exactly the module's chain: v2=v*0.5; v3=v*0.70710678...; v6 = v2 * (erf(v3) + 1)
    return (v * 0.5) * (_erf_f32(v * 0.7071067811865476, use_pallas_recip=use_pallas_recip) + 1.0)


# --------------------------------------- fused kernel body ----------------------------------------
def _fused_kernel(x_ref, w1_ref, b1_ref, w2_ref, b2_ref, out_ref, *,
                  C_in, C_mid, C_out, Lout, NB):
    # Columns 0 and Lout-1 are conv2's own zero padding -> output there is exactly b2.
    col = lax.broadcasted_iota(jnp.int32, (1, Lout), 1)
    edge = jnp.logical_or(col == 0, col == Lout - 1)

    for s in range(NB):                                    # static unroll over samples in the block
        # conv1 (1x1) -> erf-GELU, fully lane-dense rows of width Lout, f32 accumulation.
        xs = [x_ref[s, k:k + 1, :] for k in range(C_in)]   # each (1, Lout)
        gs = []
        for m in range(C_mid):
            acc = w1_ref[m, 0] * xs[0]
            for k in range(1, C_in):
                acc = acc + w1_ref[m, k] * xs[k]
            gs.append(_gelu_erf(acc + b1_ref[m], use_pallas_recip=True))

        # conv2 (1x1) over the whole length axis; one lane-dense, 0-aligned store per output row,
        # with the two conv2-padding columns folded in via `where`.
        for o in range(C_out):
            acc = w2_ref[o, 0] * gs[0]
            for m in range(1, C_mid):
                acc = acc + w2_ref[o, m] * gs[m]
            acc = acc + b2_ref[o]
            out_ref[s, o:o + 1, :] = jnp.where(edge, b2_ref[o], acc)


# ------------------------------------------- wrapper ----------------------------------------------
@jax.jit
def fused_forward(x, w1, b1, w2, b2):
    N, C_in, H, W = x.shape
    C_mid = w1.shape[0]
    C_out = w2.shape[0]
    Hp, Wp = H + 2, W + 2
    L = Hp * Wp
    Lout = L + 2

    x = x.astype(jnp.float32)
    w1 = w1.astype(jnp.float32)
    b1 = b1.astype(jnp.float32)
    w2 = w2.astype(jnp.float32)
    b2 = b2.astype(jnp.float32)

    # Wrapper-side layout glue (a few KiB of XLA pads/reshape):
    #   * conv1's zero border (1x1 conv of zeros + bias handled naturally in-kernel),
    #   * flatten spatial dims onto one lane-dense length axis,
    #   * conv2's two zero-pad columns (overwritten with b2 in-kernel).
    xp = jnp.pad(x, ((0, 0), (0, 0), (1, 1), (1, 1)))          # (N, C_in, Hp, Wp)
    xflat = xp.reshape(N, C_in, L)
    xflat = jnp.pad(xflat, ((0, 0), (0, 0), (1, 1)))           # (N, C_in, Lout)

    # Sample blocking: amortize per-grid-step overhead but keep >=2 parallel steps for v7x's 2 TCs.
    if N >= 2 and N % 2 == 0:
        nb = N // 2
    else:
        nb = 1
    grid = (N // nb,)

    kernel = functools.partial(_fused_kernel, C_in=C_in, C_mid=C_mid, C_out=C_out,
                               Lout=Lout, NB=nb)

    return pl.pallas_call(
        kernel,
        out_shape=jax.ShapeDtypeStruct((N, C_out, Lout), jnp.float32),
        grid=grid,
        in_specs=[
            pl.BlockSpec((nb, C_in, Lout), lambda n: (n, 0, 0)),         # per-block input slab
            pl.BlockSpec(memory_space=pltpu.MemorySpace.SMEM),           # w1 (C_mid, C_in)
            pl.BlockSpec(memory_space=pltpu.MemorySpace.SMEM),           # b1 (C_mid,)
            pl.BlockSpec(memory_space=pltpu.MemorySpace.SMEM),           # w2 (C_out, C_mid)
            pl.BlockSpec(memory_space=pltpu.MemorySpace.SMEM),           # b2 (C_out,)
        ],
        out_specs=pl.BlockSpec((nb, C_out, Lout), lambda n: (n, 0, 0)),
        compiler_params=pltpu.CompilerParams(dimension_semantics=("parallel",)),
    )(xflat, w1, b1, w2, b2)


# ------------------------------------- pure-JAX reference -----------------------------------------
def reference_forward(x, w1, b1, w2, b2):
    N, C_in, H, W = x.shape
    C_mid = w1.shape[0]
    # conv1 (1x1, padding=1): explicit f32 broadcast-sum (no reduced-precision dot)
    xp = jnp.pad(x, ((0, 0), (0, 0), (1, 1), (1, 1)))
    v1 = (xp[:, None, :, :, :] * w1[None, :, :, None, None]).sum(axis=2) + b1[None, :, None, None]
    v6 = _gelu_erf(v1)
    v6f = v6.reshape(N, C_mid, (H + 2) * (W + 2))
    v6p = jnp.pad(v6f, ((0, 0), (0, 0), (1, 1)))
    v7 = (v6p[:, None, :, :] * w2[None, :, :, None]).sum(axis=2) + b2[None, :, None]
    return v7


if __name__ == "__main__":
    key = jax.random.PRNGKey(0)
    kx, k1, k2, k3, k4 = jax.random.split(key, 5)

    N, C_in, H, W = 2, 3, 16, 16        # channel counts 3 -> 4 -> 12 are fixed by the module
    C_mid, C_out = 4, 12

    x = jax.random.normal(kx, (N, C_in, H, W), dtype=jnp.float32)
    w1 = 0.5 * jax.random.normal(k1, (C_mid, C_in), dtype=jnp.float32)
    b1 = 0.1 * jax.random.normal(k2, (C_mid,), dtype=jnp.float32)
    w2 = 0.5 * jax.random.normal(k3, (C_out, C_mid), dtype=jnp.float32)
    b2 = 0.1 * jax.random.normal(k4, (C_out,), dtype=jnp.float32)

    out = jax.block_until_ready(fused_forward(x, w1, b1, w2, b2))
    ref = jax.block_until_ready(reference_forward(x, w1, b1, w2, b2))

    expected_shape = (N, C_out, (H + 2) * (W + 2) + 2)
    assert out.shape == expected_shape, (out.shape, expected_shape)
    np.testing.assert_allclose(np.asarray(out), np.asarray(ref), rtol=1e-4, atol=1e-4)
    print("KERNEL_OK")
</pallas_src>

<mosaic_0001>
module attributes {stable_mosaic.version = 11 : i64} {
  func.func @_fused_kernel(%arg0: i32, %arg1: memref<1x3x326xf32, #tpu.memory_space<vmem>>, %arg2: memref<4x3xf32, #tpu.memory_space<smem>>, %arg3: memref<4xf32, #tpu.memory_space<smem>>, %arg4: memref<12x4xf32, #tpu.memory_space<smem>>, %arg5: memref<12xf32, #tpu.memory_space<smem>>, %arg6: memref<1x12x326xf32, #tpu.memory_space<vmem>>) attributes {dimension_semantics = [#tpu.dimension_semantics<parallel>], iteration_bounds = array<i64: 2>, scalar_prefetch = 0 : i64, scratch_operands = 0 : i64, tpu.core_type = #tpu.core_type<tc>, window_params = [{transform_indices = @transform_0, window_bounds = array<i64: 1, 3, 326>}, {transform_indices = @transform_1, window_bounds = array<i64: 4, 3>}, {transform_indices = @transform_2, window_bounds = array<i64: 4>}, {transform_indices = @transform_3, window_bounds = array<i64: 12, 4>}, {transform_indices = @transform_4, window_bounds = array<i64: 12>}, {transform_indices = @transform_5, window_bounds = array<i64: 1, 12, 326>}]} {
    %0 = tpu.iota {dimensions = array<i32: 1>} : vector<1x326xi32>
    %c0_i32 = arith.constant 0 : i32
    %1 = vector.broadcast %c0_i32 : i32 to vector<1x326xi32>
    %2 = arith.cmpi eq, %0, %1 : vector<1x326xi32>
    %c325_i32 = arith.constant 325 : i32
    %3 = vector.broadcast %c325_i32 : i32 to vector<1x326xi32>
    %4 = arith.cmpi eq, %0, %3 : vector<1x326xi32>
    %5 = arith.ori %2, %4 : vector<1x326xi1>
    %c0 = arith.constant 0 : index
    %c0_0 = arith.constant 0 : index
    %c0_1 = arith.constant 0 : index
    %6 = vector.load %arg1[%c0, %c0_0, %c0_1] : memref<1x3x326xf32, #tpu.memory_space<vmem>>, vector<1x1x326xf32>
    %7 = vector.shape_cast %6 : vector<1x1x326xf32> to vector<1x326xf32>
    %c0_2 = arith.constant 0 : index
    %c1 = arith.constant 1 : index
    %c0_3 = arith.constant 0 : index
    %8 = vector.load %arg1[%c0_2, %c1, %c0_3] : memref<1x3x326xf32, #tpu.memory_space<vmem>>, vector<1x1x326xf32>
    %9 = vector.shape_cast %8 : vector<1x1x326xf32> to vector<1x326xf32>
    %c0_4 = arith.constant 0 : index
    %c2 = arith.constant 2 : index
    %c0_5 = arith.constant 0 : index
    %10 = vector.load %arg1[%c0_4, %c2, %c0_5] : memref<1x3x326xf32, #tpu.memory_space<vmem>>, vector<1x1x326xf32>
    %11 = vector.shape_cast %10 : vector<1x1x326xf32> to vector<1x326xf32>
    %c0_6 = arith.constant 0 : index
    %c0_7 = arith.constant 0 : index
    %12 = memref.load %arg2[%c0_6, %c0_7] : memref<4x3xf32, #tpu.memory_space<smem>>
    %13 = vector.broadcast %12 : f32 to vector<1x326xf32>
    %14 = arith.mulf %13, %7 : vector<1x326xf32>
    %c0_8 = arith.constant 0 : index
    %c1_9 = arith.constant 1 : index
    %15 = memref.load %arg2[%c0_8, %c1_9] : memref<4x3xf32, #tpu.memory_space<smem>>
    %16 = vector.broadcast %15 : f32 to vector<1x326xf32>
    %17 = arith.mulf %16, %9 : vector<1x326xf32>
    %18 = arith.addf %14, %17 : vector<1x326xf32>
    %c0_10 = arith.constant 0 : index
    %c2_11 = arith.constant 2 : index
    %19 = memref.load %arg2[%c0_10, %c2_11] : memref<4x3xf32, #tpu.memory_space<smem>>
    %20 = vector.broadcast %19 : f32 to vector<1x326xf32>
    %21 = arith.mulf %20, %11 : vector<1x326xf32>
    %22 = arith.addf %18, %21 : vector<1x326xf32>
    %c0_12 = arith.constant 0 : index
    %23 = memref.load %arg3[%c0_12] : memref<4xf32, #tpu.memory_space<smem>>
    %24 = vector.broadcast %23 : f32 to vector<1x326xf32>
    %25 = arith.addf %22, %24 : vector<1x326xf32>
    %cst = arith.constant 5.000000e-01 : f32
    %26 = vector.broadcast %cst : f32 to vector<1x326xf32>
    %27 = arith.mulf %25, %26 : vector<1x326xf32>
    %cst_13 = arith.constant 0.707106769 : f32
    %28 = vector.broadcast %cst_13 : f32 to vector<1x326xf32>
    %29 = arith.mulf %25, %28 : vector<1x326xf32>
    %cst_14 = arith.constant -4.000000e+00 : f32
    %cst_15 = arith.constant 4.000000e+00 : f32
    %30 = vector.broadcast %cst_14 : f32 to vector<1x326xf32>
    %31 = arith.maximumf %30, %29 : vector<1x326xf32>
    %32 = vector.broadcast %cst_15 : f32 to vector<1x326xf32>
    %33 = arith.minimumf %32, %31 : vector<1x326xf32>
    %34 = arith.mulf %33, %33 : vector<1x326xf32>
    %cst_16 = arith.constant -2.72614237E-10 : f32
    %35 = vector.broadcast %cst_16 : f32 to vector<1x326xf32>
    %36 = arith.mulf %35, %34 : vector<1x326xf32>
    %cst_17 = arith.constant 2.77068146E-8 : f32
    %37 = vector.broadcast %cst_17 : f32 to vector<1x326xf32>
    %38 = arith.addf %36, %37 : vector<1x326xf32>
    %39 = arith.mulf %38, %34 : vector<1x326xf32>
    %cst_18 = arith.constant -2.10102394E-6 : f32
    %40 = vector.broadcast %cst_18 : f32 to vector<1x326xf32>
    %41 = arith.addf %39, %40 : vector<1x326xf32>
    %42 = arith.mulf %41, %34 : vector<1x326xf32>
    %cst_19 = arith.constant -5.69250624E-5 : f32
    %43 = vector.broadcast %cst_19 : f32 to vector<1x326xf32>
    %44 = arith.addf %42, %43 : vector<1x326xf32>
    %45 = arith.mulf %44, %34 : vector<1x326xf32>
    %cst_20 = arith.constant -7.34990637E-4 : f32
    %46 = vector.broadcast %cst_20 : f32 to vector<1x326xf32>
    %47 = arith.addf %45, %46 : vector<1x326xf32>
    %48 = arith.mulf %47, %34 : vector<1x326xf32>
    %cst_21 = arith.constant -2.954600e-03 : f32
    %49 = vector.broadcast %cst_21 : f32 to vector<1x326xf32>
    %50 = arith.addf %48, %49 : vector<1x326xf32>
    %51 = arith.mulf %50, %34 : vector<1x326xf32>
    %cst_22 = arith.constant -0.0160960332 : f32
    %52 = vector.broadcast %cst_22 : f32 to vector<1x326xf32>
    %53 = arith.addf %51, %52 : vector<1x326xf32>
    %cst_23 = arith.constant -1.45660715E-5 : f32
    %54 = vector.broadcast %cst_23 : f32 to vector<1x326xf32>
    %55 = arith.mulf %54, %34 : vector<1x326xf32>
    %cst_24 = arith.constant -2.13374049E-4 : f32
    %56 = vector.broadcast %cst_24 : f32 to vector<1x326xf32>
    %57 = arith.addf %55, %56 : vector<1x326xf32>
    %58 = arith.mulf %57, %34 : vector<1x326xf32>
    %cst_25 = arith.constant -0.00168282702 : f32
    %59 = vector.broadcast %cst_25 : f32 to vector<1x326xf32>
    %60 = arith.addf %58, %59 : vector<1x326xf32>
    %61 = arith.mulf %60, %34 : vector<1x326xf32>
    %cst_26 = arith.constant -0.00737332925 : f32
    %62 = vector.broadcast %cst_26 : f32 to vector<1x326xf32>
    %63 = arith.addf %61, %62 : vector<1x326xf32>
    %64 = arith.mulf %63, %34 : vector<1x326xf32>
    %cst_27 = arith.constant -0.0142647391 : f32
    %65 = vector.broadcast %cst_27 : f32 to vector<1x326xf32>
    %66 = arith.addf %64, %65 : vector<1x326xf32>
    %67 = tpu.reciprocal %66 {approx = true} : vector<1x326xf32> -> vector<1x326xf32>
    %68 = arith.mulf %66, %67 : vector<1x326xf32>
    %cst_28 = arith.constant 2.000000e+00 : f32
    %69 = vector.broadcast %cst_28 : f32 to vector<1x326xf32>
    %70 = arith.subf %69, %68 : vector<1x326xf32>
    %71 = arith.mulf %67, %70 : vector<1x326xf32>
    %72 = arith.mulf %33, %53 : vector<1x326xf32>
    %73 = arith.mulf %72, %71 : vector<1x326xf32>
    %cst_29 = arith.constant 1.000000e+00 : f32
    %74 = vector.broadcast %cst_29 : f32 to vector<1x326xf32>
    %75 = arith.addf %73, %74 : vector<1x326xf32>
    %76 = arith.mulf %27, %75 : vector<1x326xf32>
    %c1_30 = arith.constant 1 : index
    %c0_31 = arith.constant 0 : index
    %77 = memref.load %arg2[%c1_30, %c0_31] : memref<4x3xf32, #tpu.memory_space<smem>>
    %78 = vector.broadcast %77 : f32 to vector<1x326xf32>
    %79 = arith.mulf %78, %7 : vector<1x326xf32>
    %c1_32 = arith.constant 1 : index
    %c1_33 = arith.constant 1 : index
    %80 = memref.load %arg2[%c1_32, %c1_33] : memref<4x3xf32, #tpu.memory_space<smem>>
    %81 = vector.broadcast %80 : f32 to vector<1x326xf32>
    %82 = arith.mulf %81, %9 : vector<1x326xf32>
    %83 = arith.addf %79, %82 : vector<1x326xf32>
    %c1_34 = arith.constant 1 : index
    %c2_35 = arith.constant 2 : index
    %84 = memref.load %arg2[%c1_34, %c2_35] : memref<4x3xf32, #tpu.memory_space<smem>>
    %85 = vector.broadcast %84 : f32 to vector<1x326xf32>
    %86 = arith.mulf %85, %11 : vector<1x326xf32>
    %87 = arith.addf %83, %86 : vector<1x326xf32>
    %c1_36 = arith.constant 1 : index
    %88 = memref.load %arg3[%c1_36] : memref<4xf32, #tpu.memory_space<smem>>
    %89 = vector.broadcast %88 : f32 to vector<1x326xf32>
    %90 = arith.addf %87, %89 : vector<1x326xf32>
    %cst_37 = arith.constant 5.000000e-01 : f32
    %91 = vector.broadcast %cst_37 : f32 to vector<1x326xf32>
    %92 = arith.mulf %90, %91 : vector<1x326xf32>
    %cst_38 = arith.constant 0.707106769 : f32
    %93 = vector.broadcast %cst_38 : f32 to vector<1x326xf32>
    %94 = arith.mulf %90, %93 : vector<1x326xf32>
    %cst_39 = arith.constant -4.000000e+00 : f32
    %cst_40 = arith.constant 4.000000e+00 : f32
    %95 = vector.broadcast %cst_39 : f32 to vector<1x326xf32>
    %96 = arith.maximumf %95, %94 : vector<1x326xf32>
    %97 = vector.broadcast %cst_40 : f32 to vector<1x326xf32>
    %98 = arith.minimumf %97, %96 : vector<1x326xf32>
    %99 = arith.mulf %98, %98 : vector<1x326xf32>
    %cst_41 = arith.constant -2.72614237E-10 : f32
    %100 = vector.broadcast %cst_41 : f32 to vector<1x326xf32>
    %101 = arith.mulf %100, %99 : vector<1x326xf32>
    %cst_42 = arith.constant 2.77068146E-8 : f32
    %102 = vector.broadcast %cst_42 : f32 to vector<1x326xf32>
    %103 = arith.addf %101, %102 : vector<1x326xf32>
    %104 = arith.mulf %103, %99 : vector<1x326xf32>
    %cst_43 = arith.constant -2.10102394E-6 : f32
    %105 = vector.broadcast %cst_43 : f32 to vector<1x326xf32>
    %106 = arith.addf %104, %105 : vector<1x326xf32>
    %107 = arith.mulf %106, %99 : vector<1x326xf32>
    %cst_44 = arith.constant -5.69250624E-5 : f32
    %108 = vector.broadcast %cst_44 : f32 to vector<1x326xf32>
    %109 = arith.addf %107, %108 : vector<1x326xf32>
    %110 = arith.mulf %109, %99 : vector<1x326xf32>
    %cst_45 = arith.constant -7.34990637E-4 : f32
    %111 = vector.broadcast %cst_45 : f32 to vector<1x326xf32>
    %112 = arith.addf %110, %111 : vector<1x326xf32>
    %113 = arith.mulf %112, %99 : vector<1x326xf32>
    %cst_46 = arith.constant -2.954600e-03 : f32
    %114 = vector.broadcast %cst_46 : f32 to vector<1x326xf32>
    %115 = arith.addf %113, %114 : vector<1x326xf32>
    %116 = arith.mulf %115, %99 : vector<1x326xf32>
    %cst_47 = arith.constant -0.0160960332 : f32
    %117 = vector.broadcast %cst_47 : f32 to vector<1x326xf32>
    %118 = arith.addf %116, %117 : vector<1x326xf32>
    %cst_48 = arith.constant -1.45660715E-5 : f32
    %119 = vector.broadcast %cst_48 : f32 to vector<1x326xf32>
    %120 = arith.mulf %119, %99 : vector<1x326xf32>
    %cst_49 = arith.constant -2.13374049E-4 : f32
    %121 = vector.broadcast %cst_49 : f32 to vector<1x326xf32>
    %122 = arith.addf %120, %121 : vector<1x326xf32>
    %123 = arith.mulf %122, %99 : vector<1x326xf32>
    %cst_50 = arith.constant -0.00168282702 : f32
    %124 = vector.broadcast %cst_50 : f32 to vector<1x326xf32>
    %125 = arith.addf %123, %124 : vector<1x326xf32>
    %126 = arith.mulf %125, %99 : vector<1x326xf32>
    %cst_51 = arith.constant -0.00737332925 : f32
    %127 = vector.broadcast %cst_51 : f32 to vector<1x326xf32>
    %128 = arith.addf %126, %127 : vector<1x326xf32>
    %129 = arith.mulf %128, %99 : vector<1x326xf32>
    %cst_52 = arith.constant -0.0142647391 : f32
    %130 = vector.broadcast %cst_52 : f32 to vector<1x326xf32>
    %131 = arith.addf %129, %130 : vector<1x326xf32>
    %132 = tpu.reciprocal %131 {approx = true} : vector<1x326xf32> -> vector<1x326xf32>
    %133 = arith.mulf %131, %132 : vector<1x326xf32>
    %cst_53 = arith.constant 2.000000e+00 : f32
    %134 = vector.broadcast %cst_53 : f32 to vector<1x326xf32>
    %135 = arith.subf %134, %133 : vector<1x326xf32>
    %136 = arith.mulf %132, %135 : vector<1x326xf32>
    %137 = arith.mulf %98, %118 : vector<1x326xf32>
    %138 = arith.mulf %137, %136 : vector<1x326xf32>
    %cst_54 = arith.constant 1.000000e+00 : f32
    %139 = vector.broadcast %cst_54 : f32 to vector<1x326xf32>
    %140 = arith.addf %138, %139 : vector<1x326xf32>
    %141 = arith.mulf %92, %140 : vector<1x326xf32>
    %c2_55 = arith.constant 2 : index
    %c0_56 = arith.constant 0 : index
    %142 = memref.load %arg2[%c2_55, %c0_56] : memref<4x3xf32, #tpu.memory_space<smem>>
    %143 = vector.broadcast %142 : f32 to vector<1x326xf32>
    %144 = arith.mulf %143, %7 : vector<1x326xf32>
    %c2_57 = arith.constant 2 : index
    %c1_58 = arith.constant 1 : index
    %145 = memref.load %arg2[%c2_57, %c1_58] : memref<4x3xf32, #tpu.memory_space<smem>>
    %146 = vector.broadcast %145 : f32 to vector<1x326xf32>
    %147 = arith.mulf %146, %9 : vector<1x326xf32>
    %148 = arith.addf %144, %147 : vector<1x326xf32>
    %c2_59 = arith.constant 2 : index
    %c2_60 = arith.constant 2 : index
    %149 = memref.load %arg2[%c2_59, %c2_60] : memref<4x3xf32, #tpu.memory_space<smem>>
    %150 = vector.broadcast %149 : f32 to vector<1x326xf32>
    %151 = arith.mulf %150, %11 : vector<1x326xf32>
    %152 = arith.addf %148, %151 : vector<1x326xf32>
    %c2_61 = arith.constant 2 : index
    %153 = memref.load %arg3[%c2_61] : memref<4xf32, #tpu.memory_space<smem>>
    %154 = vector.broadcast %153 : f32 to vector<1x326xf32>
    %155 = arith.addf %152, %154 : vector<1x326xf32>
    %cst_62 = arith.constant 5.000000e-01 : f32
    %156 = vector.broadcast %cst_62 : f32 to vector<1x326xf32>
    %157 = arith.mulf %155, %156 : vector<1x326xf32>
    %cst_63 = arith.constant 0.707106769 : f32
    %158 = vector.broadcast %cst_63 : f32 to vector<1x326xf32>
    %159 = arith.mulf %155, %158 : vector<1x326xf32>
    %cst_64 = arith.constant -4.000000e+00 : f32
    %cst_65 = arith.constant 4.000000e+00 : f32
    %160 = vector.broadcast %cst_64 : f32 to vector<1x326xf32>
    %161 = arith.maximumf %160, %159 : vector<1x326xf32>
    %162 = vector.broadcast %cst_65 : f32 to vector<1x326xf32>
    %163 = arith.minimumf %162, %161 : vector<1x326xf32>
    %164 = arith.mulf %163, %163 : vector<1x326xf32>
    %cst_66 = arith.constant -2.72614237E-10 : f32
    %165 = vector.broadcast %cst_66 : f32 to vector<1x326xf32>
    %166 = arith.mulf %165, %164 : vector<1x326xf32>
    %cst_67 = arith.constant 2.77068146E-8 : f32
    %167 = vector.broadcast %cst_67 : f32 to vector<1x326xf32>
    %168 = arith.addf %166, %167 : vector<1x326xf32>
    %169 = arith.mulf %168, %164 : vector<1x326xf32>
    %cst_68 = arith.constant -2.10102394E-6 : f32
    %170 = vector.broadcast %cst_68 : f32 to vector<1x326xf32>
    %171 = arith.addf %169, %170 : vector<1x326xf32>
    %172 = arith.mulf %171, %164 : vector<1x326xf32>
    %cst_69 = arith.constant -5.69250624E-5 : f32
    %173 = vector.broadcast %cst_69 : f32 to vector<1x326xf32>
    %174 = arith.addf %172, %173 : vector<1x326xf32>
    %175 = arith.mulf %174, %164 : vector<1x326xf32>
    %cst_70 = arith.constant -7.34990637E-4 : f32
    %176 = vector.broadcast %cst_70 : f32 to vector<1x326xf32>
    %177 = arith.addf %175, %176 : vector<1x326xf32>
    %178 = arith.mulf %177, %164 : vector<1x326xf32>
    %cst_71 = arith.constant -2.954600e-03 : f32
    %179 = vector.broadcast %cst_71 : f32 to vector<1x326xf32>
    %180 = arith.addf %178, %179 : vector<1x326xf32>
    %181 = arith.mulf %180, %164 : vector<1x326xf32>
    %cst_72 = arith.constant -0.0160960332 : f32
    %182 = vector.broadcast %cst_72 : f32 to vector<1x326xf32>
    %183 = arith.addf %181, %182 : vector<1x326xf32>
    %cst_73 = arith.constant -1.45660715E-5 : f32
    %184 = vector.broadcast %cst_73 : f32 to vector<1x326xf32>
    %185 = arith.mulf %184, %164 : vector<1x326xf32>
    %cst_74 = arith.constant -2.13374049E-4 : f32
    %186 = vector.broadcast %cst_74 : f32 to vector<1x326xf32>
    %187 = arith.addf %185, %186 : vector<1x326xf32>
    %188 = arith.mulf %187, %164 : vector<1x326xf32>
    %cst_75 = arith.constant -0.00168282702 : f32
    %189 = vector.broadcast %cst_75 : f32 to vector<1x326xf32>
    %190 = arith.addf %188, %189 : vector<1x326xf32>
    %191 = arith.mulf %190, %164 : vector<1x326xf32>
    %cst_76 = arith.constant -0.00737332925 : f32
    %192 = vector.broadcast %cst_76 : f32 to vector<1x326xf32>
    %193 = arith.addf %191, %192 : vector<1x326xf32>
    %194 = arith.mulf %193, %164 : vector<1x326xf32>
    %cst_77 = arith.constant -0.0142647391 : f32
    %195 = vector.broadcast %cst_77 : f32 to vector<1x326xf32>
    %196 = arith.addf %194, %195 : vector<1x326xf32>
    %197 = tpu.reciprocal %196 {approx = true} : vector<1x326xf32> -> vector<1x326xf32>
    %198 = arith.mulf %196, %197 : vector<1x326xf32>
    %cst_78 = arith.constant 2.000000e+00 : f32
    %199 = vector.broadcast %cst_78 : f32 to vector<1x326xf32>
    %200 = arith.subf %199, %198 : vector<1x326xf32>
    %201 = arith.mulf %197, %200 : vector<1x326xf32>
    %202 = arith.mulf %163, %183 : vector<1x326xf32>
    %203 = arith.mulf %202, %201 : vector<1x326xf32>
    %cst_79 = arith.constant 1.000000e+00 : f32
    %204 = vector.broadcast %cst_79 : f32 to vector<1x326xf32>
    %205 = arith.addf %203, %204 : vector<1x326xf32>
    %206 = arith.mulf %157, %205 : vector<1x326xf32>
    %c3 = arith.constant 3 : index
    %c0_80 = arith.constant 0 : index
    %207 = memref.load %arg2[%c3, %c0_80] : memref<4x3xf32, #tpu.memory_space<smem>>
    %208 = vector.broadcast %207 : f32 to vector<1x326xf32>
    %209 = arith.mulf %208, %7 : vector<1x326xf32>
    %c3_81 = arith.constant 3 : index
    %c1_82 = arith.constant 1 : index
    %210 = memref.load %arg2[%c3_81, %c1_82] : memref<4x3xf32, #tpu.memory_space<smem>>
    %211 = vector.broadcast %210 : f32 to vector<1x326xf32>
    %212 = arith.mulf %211, %9 : vector<1x326xf32>
    %213 = arith.addf %209, %212 : vector<1x326xf32>
    %c3_83 = arith.constant 3 : index
    %c2_84 = arith.constant 2 : index
    %214 = memref.load %arg2[%c3_83, %c2_84] : memref<4x3xf32, #tpu.memory_space<smem>>
    %215 = vector.broadcast %214 : f32 to vector<1x326xf32>
    %216 = arith.mulf %215, %11 : vector<1x326xf32>
    %217 = arith.addf %213, %216 : vector<1x326xf32>
    %c3_85 = arith.constant 3 : index
    %218 = memref.load %arg3[%c3_85] : memref<4xf32, #tpu.memory_space<smem>>
    %219 = vector.broadcast %218 : f32 to vector<1x326xf32>
    %220 = arith.addf %217, %219 : vector<1x326xf32>
    %cst_86 = arith.constant 5.000000e-01 : f32
    %221 = vector.broadcast %cst_86 : f32 to vector<1x326xf32>
    %222 = arith.mulf %220, %221 : vector<1x326xf32>
    %cst_87 = arith.constant 0.707106769 : f32
    %223 = vector.broadcast %cst_87 : f32 to vector<1x326xf32>
    %224 = arith.mulf %220, %223 : vector<1x326xf32>
    %cst_88 = arith.constant -4.000000e+00 : f32
    %cst_89 = arith.constant 4.000000e+00 : f32
    %225 = vector.broadcast %cst_88 : f32 to vector<1x326xf32>
    %226 = arith.maximumf %225, %224 : vector<1x326xf32>
    %227 = vector.broadcast %cst_89 : f32 to vector<1x326xf32>
    %228 = arith.minimumf %227, %226 : vector<1x326xf32>
    %229 = arith.mulf %228, %228 : vector<1x326xf32>
    %cst_90 = arith.constant -2.72614237E-10 : f32
    %230 = vector.broadcast %cst_90 : f32 to vector<1x326xf32>
    %231 = arith.mulf %230, %229 : vector<1x326xf32>
    %cst_91 = arith.constant 2.77068146E-8 : f32
    %232 = vector.broadcast %cst_91 : f32 to vector<1x326xf32>
    %233 = arith.addf %231, %232 : vector<1x326xf32>
    %234 = arith.mulf %233, %229 : vector<1x326xf32>
    %cst_92 = arith.constant -2.10102394E-6 : f32
    %235 = vector.broadcast %cst_92 : f32 to vector<1x326xf32>
    %236 = arith.addf %234, %235 : vector<1x326xf32>
    %237 = arith.mulf %236, %229 : vector<1x326xf32>
    %cst_93 = arith.constant -5.69250624E-5 : f32
    %238 = vector.broadcast %cst_93 : f32 to vector<1x326xf32>
    %239 = arith.addf %237, %238 : vector<1x326xf32>
    %240 = arith.mulf %239, %229 : vector<1x326xf32>
    %cst_94 = arith.constant -7.34990637E-4 : f32
    %241 = vector.broadcast %cst_94 : f32 to vector<1x326xf32>
    %242 = arith.addf %240, %241 : vector<1x326xf32>
    %243 = arith.mulf %242, %229 : vector<1x326xf32>
    %cst_95 = arith.constant -2.954600e-03 : f32
    %244 = vector.broadcast %cst_95 : f32 to vector<1x326xf32>
    %245 = arith.addf %243, %244 : vector<1x326xf32>
    %246 = arith.mulf %245, %229 : vector<1x326xf32>
    %cst_96 = arith.constant -0.0160960332 : f32
    %247 = vector.broadcast %cst_96 : f32 to vector<1x326xf32>
    %248 = arith.addf %246, %247 : vector<1x326xf32>
    %cst_97 = arith.constant -1.45660715E-5 : f32
    %249 = vector.broadcast %cst_97 : f32 to vector<1x326xf32>
    %250 = arith.mulf %249, %229 : vector<1x326xf32>
    %cst_98 = arith.constant -2.13374049E-4 : f32
    %251 = vector.broadcast %cst_98 : f32 to vector<1x326xf32>
    %252 = arith.addf %250, %251 : vector<1x326xf32>
    %253 = arith.mulf %252, %229 : vector<1x326xf32>
    %cst_99 = arith.constant -0.00168282702 : f32
    %254 = vector.broadcast %cst_99 : f32 to vector<1x326xf32>
    %255 = arith.addf %253, %254 : vector<1x326xf32>
    %256 = arith.mulf %255, %229 : vector<1x326xf32>
    %cst_100 = arith.constant -0.00737332925 : f32
    %257 = vector.broadcast %cst_100 : f32 to vector<1x326xf32>
    %258 = arith.addf %256, %257 : vector<1x326xf32>
    %259 = arith.mulf %258, %229 : vector<1x326xf32>
    %cst_101 = arith.constant -0.0142647391 : f32
    %260 = vector.broadcast %cst_101 : f32 to vector<1x326xf32>
    %261 = arith.addf %259, %260 : vector<1x326xf32>
    %262 = tpu.reciprocal %261 {approx = true} : vector<1x326xf32> -> vector<1x326xf32>
    %263 = arith.mulf %261, %262 : vector<1x326xf32>
    %cst_102 = arith.constant 2.000000e+00 : f32
    %264 = vector.broadcast %cst_102 : f32 to vector<1x326xf32>
    %265 = arith.subf %264, %263 : vector<1x326xf32>
    %266 = arith.mulf %262, %265 : vector<1x326xf32>
    %267 = arith.mulf %228, %248 : vector<1x326xf32>
    %268 = arith.mulf %267, %266 : vector<1x326xf32>
    %cst_103 = arith.constant 1.000000e+00 : f32
    %269 = vector.broadcast %cst_103 : f32 to vector<1x326xf32>
    %270 = arith.addf %268, %269 : vector<1x326xf32>
    %271 = arith.mulf %222, %270 : vector<1x326xf32>
    %c0_104 = arith.constant 0 : index
    %c0_105 = arith.constant 0 : index
    %272 = memref.load %arg4[%c0_104, %c0_105] : memref<12x4xf32, #tpu.memory_space<smem>>
    %273 = vector.broadcast %272 : f32 to vector<1x326xf32>
    %274 = arith.mulf %273, %76 : vector<1x326xf32>
    %c0_106 = arith.constant 0 : index
    %c1_107 = arith.constant 1 : index
    %275 = memref.load %arg4[%c0_106, %c1_107] : memref<12x4xf32, #tpu.memory_space<smem>>
    %276 = vector.broadcast %275 : f32 to vector<1x326xf32>
    %277 = arith.mulf %276, %141 : vector<1x326xf32>
    %278 = arith.addf %274, %277 : vector<1x326xf32>
    %c0_108 = arith.constant 0 : index
    %c2_109 = arith.constant 2 : index
    %279 = memref.load %arg4[%c0_108, %c2_109] : memref<12x4xf32, #tpu.memory_space<smem>>
    %280 = vector.broadcast %279 : f32 to vector<1x326xf32>
    %281 = arith.mulf %280, %206 : vector<1x326xf32>
    %282 = arith.addf %278, %281 : vector<1x326xf32>
    %c0_110 = arith.constant 0 : index
    %c3_111 = arith.constant 3 : index
    %283 = memref.load %arg4[%c0_110, %c3_111] : memref<12x4xf32, #tpu.memory_space<smem>>
    %284 = vector.broadcast %283 : f32 to vector<1x326xf32>
    %285 = arith.mulf %284, %271 : vector<1x326xf32>
    %286 = arith.addf %282, %285 : vector<1x326xf32>
    %c0_112 = arith.constant 0 : index
    %287 = memref.load %arg5[%c0_112] : memref<12xf32, #tpu.memory_space<smem>>
    %288 = vector.broadcast %287 : f32 to vector<1x326xf32>
    %289 = arith.addf %286, %288 : vector<1x326xf32>
    %c0_113 = arith.constant 0 : index
    %290 = memref.load %arg5[%c0_113] : memref<12xf32, #tpu.memory_space<smem>>
    %291 = vector.broadcast %290 : f32 to vector<1x326xf32>
    %292 = arith.select %5, %291, %289 : vector<1x326xi1>, vector<1x326xf32>
    %c0_114 = arith.constant 0 : index
    %c0_115 = arith.constant 0 : index
    %c0_116 = arith.constant 0 : index
    %293 = vector.load %arg6[%c0_114, %c0_115, %c0_116] : memref<1x12x326xf32, #tpu.memory_space<vmem>>, vector<1x1x326xf32>
    %294 = vector.shape_cast %293 : vector<1x1x326xf32> to vector<1x326xf32>
    %295 = vector.shape_cast %292 : vector<1x326xf32> to vector<1x1x326xf32>
    tpu.vector_store %arg6[%c0_114, %c0_115, %c0_116], %295 {strides = array<i32>} : memref<1x12x326xf32, #tpu.memory_space<vmem>>, vector<1x1x326xf32>,
    %c1_117 = arith.constant 1 : index
    %c0_118 = arith.constant 0 : index
    %296 = memref.load %arg4[%c1_117, %c0_118] : memref<12x4xf32, #tpu.memory_space<smem>>
    %297 = vector.broadcast %296 : f32 to vector<1x326xf32>
    %298 = arith.mulf %297, %76 : vector<1x326xf32>
    %c1_119 = arith.constant 1 : index
    %c1_120 = arith.constant 1 : index
    %299 = memref.load %arg4[%c1_119, %c1_120] : memref<12x4xf32, #tpu.memory_space<smem>>
    %300 = vector.broadcast %299 : f32 to vector<1x326xf32>
    %301 = arith.mulf %300, %141 : vector<1x326xf32>
    %302 = arith.addf %298, %301 : vector<1x326xf32>
    %c1_121 = arith.constant 1 : index
    %c2_122 = arith.constant 2 : index
    %303 = memref.load %arg4[%c1_121, %c2_122] : memref<12x4xf32, #tpu.memory_space<smem>>
    %304 = vector.broadcast %303 : f32 to vector<1x326xf32>
    %305 = arith.mulf %304, %206 : vector<1x326xf32>
    %306 = arith.addf %302, %305 : vector<1x326xf32>
    %c1_123 = arith.constant 1 : index
    %c3_124 = arith.constant 3 : index
    %307 = memref.load %arg4[%c1_123, %c3_124] : memref<12x4xf32, #tpu.memory_space<smem>>
    %308 = vector.broadcast %307 : f32 to vector<1x326xf32>
    %309 = arith.mulf %308, %271 : vector<1x326xf32>
    %310 = arith.addf %306, %309 : vector<1x326xf32>
    %c1_125 = arith.constant 1 : index
    %311 = memref.load %arg5[%c1_125] : memref<12xf32, #tpu.memory_space<smem>>
    %312 = vector.broadcast %311 : f32 to vector<1x326xf32>
    %313 = arith.addf %310, %312 : vector<1x326xf32>
    %c1_126 = arith.constant 1 : index
    %314 = memref.load %arg5[%c1_126] : memref<12xf32, #tpu.memory_space<smem>>
    %315 = vector.broadcast %314 : f32 to vector<1x326xf32>
    %316 = arith.select %5, %315, %313 : vector<1x326xi1>, vector<1x326xf32>
    %c0_127 = arith.constant 0 : index
    %c1_128 = arith.constant 1 : index
    %c0_129 = arith.constant 0 : index
    %317 = vector.load %arg6[%c0_127, %c1_128, %c0_129] : memref<1x12x326xf32, #tpu.memory_space<vmem>>, vector<1x1x326xf32>
    %318 = vector.shape_cast %317 : vector<1x1x326xf32> to vector<1x326xf32>
    %319 = vector.shape_cast %316 : vector<1x326xf32> to vector<1x1x326xf32>
    tpu.vector_store %arg6[%c0_127, %c1_128, %c0_129], %319 {strides = array<i32>} : memref<1x12x326xf32, #tpu.memory_space<vmem>>, vector<1x1x326xf32>,
    %c2_130 = arith.constant 2 : index
    %c0_131 = arith.constant 0 : index
    %320 = memref.load %arg4[%c2_130, %c0_131] : memref<12x4xf32, #tpu.memory_space<smem>>
    %321 = vector.broadcast %320 : f32 to vector<1x326xf32>
    %322 = arith.mulf %321, %76 : vector<1x326xf32>
    %c2_132 = arith.constant 2 : index
    %c1_133 = arith.constant 1 : index
    %323 = memref.load %arg4[%c2_132, %c1_133] : memref<12x4xf32, #tpu.memory_space<smem>>
    %324 = vector.broadcast %323 : f32 to vector<1x326xf32>
    %325 = arith.mulf %324, %141 : vector<1x326xf32>
    %326 = arith.addf %322, %325 : vector<1x326xf32>
    %c2_134 = arith.constant 2 : index
    %c2_135 = arith.constant 2 : index
    %327 = memref.load %arg4[%c2_134, %c2_135] : memref<12x4xf32, #tpu.memory_space<smem>>
    %328 = vector.broadcast %327 : f32 to vector<1x326xf32>
    %329 = arith.mulf %328, %206 : vector<1x326xf32>
    %330 = arith.addf %326, %329 : vector<1x326xf32>
    %c2_136 = arith.constant 2 : index
    %c3_137 = arith.constant 3 : index
    %331 = memref.load %arg4[%c2_136, %c3_137] : memref<12x4xf32, #tpu.memory_space<smem>>
    %332 = vector.broadcast %331 : f32 to vector<1x326xf32>
    %333 = arith.mulf %332, %271 : vector<1x326xf32>
    %334 = arith.addf %330, %333 : vector<1x326xf32>
    %c2_138 = arith.constant 2 : index
    %335 = memref.load %arg5[%c2_138] : memref<12xf32, #tpu.memory_space<smem>>
    %336 = vector.broadcast %335 : f32 to vector<1x326xf32>
    %337 = arith.addf %334, %336 : vector<1x326xf32>
    %c2_139 = arith.constant 2 : index
    %338 = memref.load %arg5[%c2_139] : memref<12xf32, #tpu.memory_space<smem>>
    %339 = vector.broadcast %338 : f32 to vector<1x326xf32>
    %340 = arith.select %5, %339, %337 : vector<1x326xi1>, vector<1x326xf32>
    %c0_140 = arith.constant 0 : index
    %c2_141 = arith.constant 2 : index
    %c0_142 = arith.constant 0 : index
    %341 = vector.load %arg6[%c0_140, %c2_141, %c0_142] : memref<1x12x326xf32, #tpu.memory_space<vmem>>, vector<1x1x326xf32>
    %342 = vector.shape_cast %341 : vector<1x1x326xf32> to vector<1x326xf32>
    %343 = vector.shape_cast %340 : vector<1x326xf32> to vector<1x1x326xf32>
    tpu.vector_store %arg6[%c0_140, %c2_141, %c0_142], %343 {strides = array<i32>} : memref<1x12x326xf32, #tpu.memory_space<vmem>>, vector<1x1x326xf32>,
    %c3_143 = arith.constant 3 : index
    %c0_144 = arith.constant 0 : index
    %344 = memref.load %arg4[%c3_143, %c0_144] : memref<12x4xf32, #tpu.memory_space<smem>>
    %345 = vector.broadcast %344 : f32 to vector<1x326xf32>
    %346 = arith.mulf %345, %76 : vector<1x326xf32>
    %c3_145 = arith.constant 3 : index
    %c1_146 = arith.constant 1 : index
    %347 = memref.load %arg4[%c3_145, %c1_146] : memref<12x4xf32, #tpu.memory_space<smem>>
    %348 = vector.broadcast %347 : f32 to vector<1x326xf32>
    %349 = arith.mulf %348, %141 : vector<1x326xf32>
    %350 = arith.addf %346, %349 : vector<1x326xf32>
    %c3_147 = arith.constant 3 : index
    %c2_148 = arith.constant 2 : index
    %351 = memref.load %arg4[%c3_147, %c2_148] : memref<12x4xf32, #tpu.memory_space<smem>>
    %352 = vector.broadcast %351 : f32 to vector<1x326xf32>
    %353 = arith.mulf %352, %206 : vector<1x326xf32>
    %354 = arith.addf %350, %353 : vector<1x326xf32>
    %c3_149 = arith.constant 3 : index
    %c3_150 = arith.constant 3 : index
    %355 = memref.load %arg4[%c3_149, %c3_150] : memref<12x4xf32, #tpu.memory_space<smem>>
    %356 = vector.broadcast %355 : f32 to vector<1x326xf32>
    %357 = arith.mulf %356, %271 : vector<1x326xf32>
    %358 = arith.addf %354, %357 : vector<1x326xf32>
    %c3_151 = arith.constant 3 : index
    %359 = memref.load %arg5[%c3_151] : memref<12xf32, #tpu.memory_space<smem>>
    %360 = vector.broadcast %359 : f32 to vector<1x326xf32>
    %361 = arith.addf %358, %360 : vector<1x326xf32>
    %c3_152 = arith.constant 3 : index
    %362 = memref.load %arg5[%c3_152] : memref<12xf32, #tpu.memory_space<smem>>
    %363 = vector.broadcast %362 : f32 to vector<1x326xf32>
    %364 = arith.select %5, %363, %361 : vector<1x326xi1>, vector<1x326xf32>
    %c0_153 = arith.constant 0 : index
    %c3_154 = arith.constant 3 : index
    %c0_155 = arith.constant 0 : index
    %365 = vector.load %arg6[%c0_153, %c3_154, %c0_155] : memref<1x12x326xf32, #tpu.memory_space<vmem>>, vector<1x1x326xf32>
    %366 = vector.shape_cast %365 : vector<1x1x326xf32> to vector<1x326xf32>
    %367 = vector.shape_cast %364 : vector<1x326xf32> to vector<1x1x326xf32>
    tpu.vector_store %arg6[%c0_153, %c3_154, %c0_155], %367 {strides = array<i32>} : memref<1x12x326xf32, #tpu.memory_space<vmem>>, vector<1x1x326xf32>,
    %c4 = arith.constant 4 : index
    %c0_156 = arith.constant 0 : index
    %368 = memref.load %arg4[%c4, %c0_156] : memref<12x4xf32, #tpu.memory_space<smem>>
    %369 = vector.broadcast %368 : f32 to vector<1x326xf32>
    %370 = arith.mulf %369, %76 : vector<1x326xf32>
    %c4_157 = arith.constant 4 : index
    %c1_158 = arith.constant 1 : index
    %371 = memref.load %arg4[%c4_157, %c1_158] : memref<12x4xf32, #tpu.memory_space<smem>>
    %372 = vector.broadcast %371 : f32 to vector<1x326xf32>
    %373 = arith.mulf %372, %141 : vector<1x326xf32>
    %374 = arith.addf %370, %373 : vector<1x326xf32>
    %c4_159 = arith.constant 4 : index
    %c2_160 = arith.constant 2 : index
    %375 = memref.load %arg4[%c4_159, %c2_160] : memref<12x4xf32, #tpu.memory_space<smem>>
    %376 = vector.broadcast %375 : f32 to vector<1x326xf32>
    %377 = arith.mulf %376, %206 : vector<1x326xf32>
    %378 = arith.addf %374, %377 : vector<1x326xf32>
    %c4_161 = arith.constant 4 : index
    %c3_162 = arith.constant 3 : index
    %379 = memref.load %arg4[%c4_161, %c3_162] : memref<12x4xf32, #tpu.memory_space<smem>>
    %380 = vector.broadcast %379 : f32 to vector<1x326xf32>
    %381 = arith.mulf %380, %271 : vector<1x326xf32>
    %382 = arith.addf %378, %381 : vector<1x326xf32>
    %c4_163 = arith.constant 4 : index
    %383 = memref.load %arg5[%c4_163] : memref<12xf32, #tpu.memory_space<smem>>
    %384 = vector.broadcast %383 : f32 to vector<1x326xf32>
    %385 = arith.addf %382, %384 : vector<1x326xf32>
    %c4_164 = arith.constant 4 : index
    %386 = memref.load %arg5[%c4_164] : memref<12xf32, #tpu.memory_space<smem>>
    %387 = vector.broadcast %386 : f32 to vector<1x326xf32>
    %388 = arith.select %5, %387, %385 : vector<1x326xi1>, vector<1x326xf32>
    %c0_165 = arith.constant 0 : index
    %c4_166 = arith.constant 4 : index
    %c0_167 = arith.constant 0 : index
    %389 = vector.load %arg6[%c0_165, %c4_166, %c0_167] : memref<1x12x326xf32, #tpu.memory_space<vmem>>, vector<1x1x326xf32>
    %390 = vector.shape_cast %389 : vector<1x1x326xf32> to vector<1x326xf32>
    %391 = vector.shape_cast %388 : vector<1x326xf32> to vector<1x1x326xf32>
    tpu.vector_store %arg6[%c0_165, %c4_166, %c0_167], %391 {strides = array<i32>} : memref<1x12x326xf32, #tpu.memory_space<vmem>>, vector<1x1x326xf32>,
    %c5 = arith.constant 5 : index
    %c0_168 = arith.constant 0 : index
    %392 = memref.load %arg4[%c5, %c0_168] : memref<12x4xf32, #tpu.memory_space<smem>>
    %393 = vector.broadcast %392 : f32 to vector<1x326xf32>
    %394 = arith.mulf %393, %76 : vector<1x326xf32>
    %c5_169 = arith.constant 5 : index
    %c1_170 = arith.constant 1 : index
    %395 = memref.load %arg4[%c5_169, %c1_170] : memref<12x4xf32, #tpu.memory_space<smem>>
    %396 = vector.broadcast %395 : f32 to vector<1x326xf32>
    %397 = arith.mulf %396, %141 : vector<1x326xf32>
    %398 = arith.addf %394, %397 : vector<1x326xf32>
    %c5_171 = arith.constant 5 : index
    %c2_172 = arith.constant 2 : index
    %399 = memref.load %arg4[%c5_171, %c2_172] : memref<12x4xf32, #tpu.memory_space<smem>>
    %400 = vector.broadcast %399 : f32 to vector<1x326xf32>
    %401 = arith.mulf %400, %206 : vector<1x326xf32>
    %402 = arith.addf %398, %401 : vector<1x326xf32>
    %c5_173 = arith.constant 5 : index
    %c3_174 = arith.constant 3 : index
    %403 = memref.load %arg4[%c5_173, %c3_174] : memref<12x4xf32, #tpu.memory_space<smem>>
    %404 = vector.broadcast %403 : f32 to vector<1x326xf32>
    %405 = arith.mulf %404, %271 : vector<1x326xf32>
    %406 = arith.addf %402, %405 : vector<1x326xf32>
    %c5_175 = arith.constant 5 : index
    %407 = memref.load %arg5[%c5_175] : memref<12xf32, #tpu.memory_space<smem>>
    %408 = vector.broadcast %407 : f32 to vector<1x326xf32>
    %409 = arith.addf %406, %408 : vector<1x326xf32>
    %c5_176 = arith.constant 5 : index
    %410 = memref.load %arg5[%c5_176] : memref<12xf32, #tpu.memory_space<smem>>
    %411 = vector.broadcast %410 : f32 to vector<1x326xf32>
    %412 = arith.select %5, %411, %409 : vector<1x326xi1>, vector<1x326xf32>
    %c0_177 = arith.constant 0 : index
    %c5_178 = arith.constant 5 : index
    %c0_179 = arith.constant 0 : index
    %413 = vector.load %arg6[%c0_177, %c5_178, %c0_179] : memref<1x12x326xf32, #tpu.memory_space<vmem>>, vector<1x1x326xf32>
    %414 = vector.shape_cast %413 : vector<1x1x326xf32> to vector<1x326xf32>
    %415 = vector.shape_cast %412 : vector<1x326xf32> to vector<1x1x326xf32>
    tpu.vector_store %arg6[%c0_177, %c5_178, %c0_179], %415 {strides = array<i32>} : memref<1x12x326xf32, #tpu.memory_space<vmem>>, vector<1x1x326xf32>,
    %c6 = arith.constant 6 : index
    %c0_180 = arith.constant 0 : index
    %416 = memref.load %arg4[%c6, %c0_180] : memref<12x4xf32, #tpu.memory_space<smem>>
    %417 = vector.broadcast %416 : f32 to vector<1x326xf32>
    %418 = arith.mulf %417, %76 : vector<1x326xf32>
    %c6_181 = arith.constant 6 : index
    %c1_182 = arith.constant 1 : index
    %419 = memref.load %arg4[%c6_181, %c1_182] : memref<12x4xf32, #tpu.memory_space<smem>>
    %420 = vector.broadcast %419 : f32 to vector<1x326xf32>
    %421 = arith.mulf %420, %141 : vector<1x326xf32>
    %422 = arith.addf %418, %421 : vector<1x326xf32>
    %c6_183 = arith.constant 6 : index
    %c2_184 = arith.constant 2 : index
    %423 = memref.load %arg4[%c6_183, %c2_184] : memref<12x4xf32, #tpu.memory_space<smem>>
    %424 = vector.broadcast %423 : f32 to vector<1x326xf32>
    %425 = arith.mulf %424, %206 : vector<1x326xf32>
    %426 = arith.addf %422, %425 : vector<1x326xf32>
    %c6_185 = arith.constant 6 : index
    %c3_186 = arith.constant 3 : index
    %427 = memref.load %arg4[%c6_185, %c3_186] : memref<12x4xf32, #tpu.memory_space<smem>>
    %428 = vector.broadcast %427 : f32 to vector<1x326xf32>
    %429 = arith.mulf %428, %271 : vector<1x326xf32>
    %430 = arith.addf %426, %429 : vector<1x326xf32>
    %c6_187 = arith.constant 6 : index
    %431 = memref.load %arg5[%c6_187] : memref<12xf32, #tpu.memory_space<smem>>
    %432 = vector.broadcast %431 : f32 to vector<1x326xf32>
    %433 = arith.addf %430, %432 : vector<1x326xf32>
    %c6_188 = arith.constant 6 : index
    %434 = memref.load %arg5[%c6_188] : memref<12xf32, #tpu.memory_space<smem>>
    %435 = vector.broadcast %434 : f32 to vector<1x326xf32>
    %436 = arith.select %5, %435, %433 : vector<1x326xi1>, vector<1x326xf32>
    %c0_189 = arith.constant 0 : index
    %c6_190 = arith.constant 6 : index
    %c0_191 = arith.constant 0 : index
    %437 = vector.load %arg6[%c0_189, %c6_190, %c0_191] : memref<1x12x326xf32, #tpu.memory_space<vmem>>, vector<1x1x326xf32>
    %438 = vector.shape_cast %437 : vector<1x1x326xf32> to vector<1x326xf32>
    %439 = vector.shape_cast %436 : vector<1x326xf32> to vector<1x1x326xf32>
    tpu.vector_store %arg6[%c0_189, %c6_190, %c0_191], %439 {strides = array<i32>} : memref<1x12x326xf32, #tpu.memory_space<vmem>>, vector<1x1x326xf32>,
    %c7 = arith.constant 7 : index
    %c0_192 = arith.constant 0 : index
    %440 = memref.load %arg4[%c7, %c0_192] : memref<12x4xf32, #tpu.memory_space<smem>>
    %441 = vector.broadcast %440 : f32 to vector<1x326xf32>
    %442 = arith.mulf %441, %76 : vector<1x326xf32>
    %c7_193 = arith.constant 7 : index
    %c1_194 = arith.constant 1 : index
    %443 = memref.load %arg4[%c7_193, %c1_194] : memref<12x4xf32, #tpu.memory_space<smem>>
    %444 = vector.broadcast %443 : f32 to vector<1x326xf32>
    %445 = arith.mulf %444, %141 : vector<1x326xf32>
    %446 = arith.addf %442, %445 : vector<1x326xf32>
    %c7_195 = arith.constant 7 : index
    %c2_196 = arith.constant 2 : index
    %447 = memref.load %arg4[%c7_195, %c2_196] : memref<12x4xf32, #tpu.memory_space<smem>>
    %448 = vector.broadcast %447 : f32 to vector<1x326xf32>
    %449 = arith.mulf %448, %206 : vector<1x326xf32>
    %450 = arith.addf %446, %449 : vector<1x326xf32>
    %c7_197 = arith.constant 7 : index
    %c3_198 = arith.constant 3 : index
    %451 = memref.load %arg4[%c7_197, %c3_198] : memref<12x4xf32, #tpu.memory_space<smem>>
    %452 = vector.broadcast %451 : f32 to vector<1x326xf32>
    %453 = arith.mulf %452, %271 : vector<1x326xf32>
    %454 = arith.addf %450, %453 : vector<1x326xf32>
    %c7_199 = arith.constant 7 : index
    %455 = memref.load %arg5[%c7_199] : memref<12xf32, #tpu.memory_space<smem>>
    %456 = vector.broadcast %455 : f32 to vector<1x326xf32>
    %457 = arith.addf %454, %456 : vector<1x326xf32>
    %c7_200 = arith.constant 7 : index
    %458 = memref.load %arg5[%c7_200] : memref<12xf32, #tpu.memory_space<smem>>
    %459 = vector.broadcast %458 : f32 to vector<1x326xf32>
    %460 = arith.select %5, %459, %457 : vector<1x326xi1>, vector<1x326xf32>
    %c0_201 = arith.constant 0 : index
    %c7_202 = arith.constant 7 : index
    %c0_203 = arith.constant 0 : index
    %461 = vector.load %arg6[%c0_201, %c7_202, %c0_203] : memref<1x12x326xf32, #tpu.memory_space<vmem>>, vector<1x1x326xf32>
    %462 = vector.shape_cast %461 : vector<1x1x326xf32> to vector<1x326xf32>
    %463 = vector.shape_cast %460 : vector<1x326xf32> to vector<1x1x326xf32>
    tpu.vector_store %arg6[%c0_201, %c7_202, %c0_203], %463 {strides = array<i32>} : memref<1x12x326xf32, #tpu.memory_space<vmem>>, vector<1x1x326xf32>,
    %c8 = arith.constant 8 : index
    %c0_204 = arith.constant 0 : index
    %464 = memref.load %arg4[%c8, %c0_204] : memref<12x4xf32, #tpu.memory_space<smem>>
    %465 = vector.broadcast %464 : f32 to vector<1x326xf32>
    %466 = arith.mulf %465, %76 : vector<1x326xf32>
    %c8_205 = arith.constant 8 : index
    %c1_206 = arith.constant 1 : index
    %467 = memref.load %arg4[%c8_205, %c1_206] : memref<12x4xf32, #tpu.memory_space<smem>>
    %468 = vector.broadcast %467 : f32 to vector<1x326xf32>
    %469 = arith.mulf %468, %141 : vector<1x326xf32>
    %470 = arith.addf %466, %469 : vector<1x326xf32>
    %c8_207 = arith.constant 8 : index
    %c2_208 = arith.constant 2 : index
    %471 = memref.load %arg4[%c8_207, %c2_208] : memref<12x4xf32, #tpu.memory_space<smem>>
    %472 = vector.broadcast %471 : f32 to vector<1x326xf32>
    %473 = arith.mulf %472, %206 : vector<1x326xf32>
    %474 = arith.addf %470, %473 : vector<1x326xf32>
    %c8_209 = arith.constant 8 : index
    %c3_210 = arith.constant 3 : index
    %475 = memref.load %arg4[%c8_209, %c3_210] : memref<12x4xf32, #tpu.memory_space<smem>>
    %476 = vector.broadcast %475 : f32 to vector<1x326xf32>
    %477 = arith.mulf %476, %271 : vector<1x326xf32>
    %478 = arith.addf %474, %477 : vector<1x326xf32>
    %c8_211 = arith.constant 8 : index
    %479 = memref.load %arg5[%c8_211] : memref<12xf32, #tpu.memory_space<smem>>
    %480 = vector.broadcast %479 : f32 to vector<1x326xf32>
    %481 = arith.addf %478, %480 : vector<1x326xf32>
    %c8_212 = arith.constant 8 : index
    %482 = memref.load %arg5[%c8_212] : memref<12xf32, #tpu.memory_space<smem>>
    %483 = vector.broadcast %482 : f32 to vector<1x326xf32>
    %484 = arith.select %5, %483, %481 : vector<1x326xi1>, vector<1x326xf32>
    %c0_213 = arith.constant 0 : index
    %c8_214 = arith.constant 8 : index
    %c0_215 = arith.constant 0 : index
    %485 = vector.load %arg6[%c0_213, %c8_214, %c0_215] : memref<1x12x326xf32, #tpu.memory_space<vmem>>, vector<1x1x326xf32>
    %486 = vector.shape_cast %485 : vector<1x1x326xf32> to vector<1x326xf32>
    %487 = vector.shape_cast %484 : vector<1x326xf32> to vector<1x1x326xf32>
    tpu.vector_store %arg6[%c0_213, %c8_214, %c0_215], %487 {strides = array<i32>} : memref<1x12x326xf32, #tpu.memory_space<vmem>>, vector<1x1x326xf32>,
    %c9 = arith.constant 9 : index
    %c0_216 = arith.constant 0 : index
    %488 = memref.load %arg4[%c9, %c0_216] : memref<12x4xf32, #tpu.memory_space<smem>>
    %489 = vector.broadcast %488 : f32 to vector<1x326xf32>
    %490 = arith.mulf %489, %76 : vector<1x326xf32>
    %c9_217 = arith.constant 9 : index
    %c1_218 = arith.constant 1 : index
    %491 = memref.load %arg4[%c9_217, %c1_218] : memref<12x4xf32, #tpu.memory_space<smem>>
    %492 = vector.broadcast %491 : f32 to vector<1x326xf32>
    %493 = arith.mulf %492, %141 : vector<1x326xf32>
    %494 = arith.addf %490, %493 : vector<1x326xf32>
    %c9_219 = arith.constant 9 : index
    %c2_220 = arith.constant 2 : index
    %495 = memref.load %arg4[%c9_219, %c2_220] : memref<12x4xf32, #tpu.memory_space<smem>>
    %496 = vector.broadcast %495 : f32 to vector<1x326xf32>
    %497 = arith.mulf %496, %206 : vector<1x326xf32>
    %498 = arith.addf %494, %497 : vector<1x326xf32>
    %c9_221 = arith.constant 9 : index
    %c3_222 = arith.constant 3 : index
    %499 = memref.load %arg4[%c9_221, %c3_222] : memref<12x4xf32, #tpu.memory_space<smem>>
    %500 = vector.broadcast %499 : f32 to vector<1x326xf32>
    %501 = arith.mulf %500, %271 : vector<1x326xf32>
    %502 = arith.addf %498, %501 : vector<1x326xf32>
    %c9_223 = arith.constant 9 : index
    %503 = memref.load %arg5[%c9_223] : memref<12xf32, #tpu.memory_space<smem>>
    %504 = vector.broadcast %503 : f32 to vector<1x326xf32>
    %505 = arith.addf %502, %504 : vector<1x326xf32>
    %c9_224 = arith.constant 9 : index
    %506 = memref.load %arg5[%c9_224] : memref<12xf32, #tpu.memory_space<smem>>
    %507 = vector.broadcast %506 : f32 to vector<1x326xf32>
    %508 = arith.select %5, %507, %505 : vector<1x326xi1>, vector<1x326xf32>
    %c0_225 = arith.constant 0 : index
    %c9_226 = arith.constant 9 : index
    %c0_227 = arith.constant 0 : index
    %509 = vector.load %arg6[%c0_225, %c9_226, %c0_227] : memref<1x12x326xf32, #tpu.memory_space<vmem>>, vector<1x1x326xf32>
    %510 = vector.shape_cast %509 : vector<1x1x326xf32> to vector<1x326xf32>
    %511 = vector.shape_cast %508 : vector<1x326xf32> to vector<1x1x326xf32>
    tpu.vector_store %arg6[%c0_225, %c9_226, %c0_227], %511 {strides = array<i32>} : memref<1x12x326xf32, #tpu.memory_space<vmem>>, vector<1x1x326xf32>,
    %c10 = arith.constant 10 : index
    %c0_228 = arith.constant 0 : index
    %512 = memref.load %arg4[%c10, %c0_228] : memref<12x4xf32, #tpu.memory_space<smem>>
    %513 = vector.broadcast %512 : f32 to vector<1x326xf32>
    %514 = arith.mulf %513, %76 : vector<1x326xf32>
    %c10_229 = arith.constant 10 : index
    %c1_230 = arith.constant 1 : index
    %515 = memref.load %arg4[%c10_229, %c1_230] : memref<12x4xf32, #tpu.memory_space<smem>>
    %516 = vector.broadcast %515 : f32 to vector<1x326xf32>
    %517 = arith.mulf %516, %141 : vector<1x326xf32>
    %518 = arith.addf %514, %517 : vector<1x326xf32>
    %c10_231 = arith.constant 10 : index
    %c2_232 = arith.constant 2 : index
    %519 = memref.load %arg4[%c10_231, %c2_232] : memref<12x4xf32, #tpu.memory_space<smem>>
    %520 = vector.broadcast %519 : f32 to vector<1x326xf32>
    %521 = arith.mulf %520, %206 : vector<1x326xf32>
    %522 = arith.addf %518, %521 : vector<1x326xf32>
    %c10_233 = arith.constant 10 : index
    %c3_234 = arith.constant 3 : index
    %523 = memref.load %arg4[%c10_233, %c3_234] : memref<12x4xf32, #tpu.memory_space<smem>>
    %524 = vector.broadcast %523 : f32 to vector<1x326xf32>
    %525 = arith.mulf %524, %271 : vector<1x326xf32>
    %526 = arith.addf %522, %525 : vector<1x326xf32>
    %c10_235 = arith.constant 10 : index
    %527 = memref.load %arg5[%c10_235] : memref<12xf32, #tpu.memory_space<smem>>
    %528 = vector.broadcast %527 : f32 to vector<1x326xf32>
    %529 = arith.addf %526, %528 : vector<1x326xf32>
    %c10_236 = arith.constant 10 : index
    %530 = memref.load %arg5[%c10_236] : memref<12xf32, #tpu.memory_space<smem>>
    %531 = vector.broadcast %530 : f32 to vector<1x326xf32>
    %532 = arith.select %5, %531, %529 : vector<1x326xi1>, vector<1x326xf32>
    %c0_237 = arith.constant 0 : index
    %c10_238 = arith.constant 10 : index
    %c0_239 = arith.constant 0 : index
    %533 = vector.load %arg6[%c0_237, %c10_238, %c0_239] : memref<1x12x326xf32, #tpu.memory_space<vmem>>, vector<1x1x326xf32>
    %534 = vector.shape_cast %533 : vector<1x1x326xf32> to vector<1x326xf32>
    %535 = vector.shape_cast %532 : vector<1x326xf32> to vector<1x1x326xf32>
    tpu.vector_store %arg6[%c0_237, %c10_238, %c0_239], %535 {strides = array<i32>} : memref<1x12x326xf32, #tpu.memory_space<vmem>>, vector<1x1x326xf32>,
    %c11 = arith.constant 11 : index
    %c0_240 = arith.constant 0 : index
    %536 = memref.load %arg4[%c11, %c0_240] : memref<12x4xf32, #tpu.memory_space<smem>>
    %537 = vector.broadcast %536 : f32 to vector<1x326xf32>
    %538 = arith.mulf %537, %76 : vector<1x326xf32>
    %c11_241 = arith.constant 11 : index
    %c1_242 = arith.constant 1 : index
    %539 = memref.load %arg4[%c11_241, %c1_242] : memref<12x4xf32, #tpu.memory_space<smem>>
    %540 = vector.broadcast %539 : f32 to vector<1x326xf32>
    %541 = arith.mulf %540, %141 : vector<1x326xf32>
    %542 = arith.addf %538, %541 : vector<1x326xf32>
    %c11_243 = arith.constant 11 : index
    %c2_244 = arith.constant 2 : index
    %543 = memref.load %arg4[%c11_243, %c2_244] : memref<12x4xf32, #tpu.memory_space<smem>>
    %544 = vector.broadcast %543 : f32 to vector<1x326xf32>
    %545 = arith.mulf %544, %206 : vector<1x326xf32>
    %546 = arith.addf %542, %545 : vector<1x326xf32>
    %c11_245 = arith.constant 11 : index
    %c3_246 = arith.constant 3 : index
    %547 = memref.load %arg4[%c11_245, %c3_246] : memref<12x4xf32, #tpu.memory_space<smem>>
    %548 = vector.broadcast %547 : f32 to vector<1x326xf32>
    %549 = arith.mulf %548, %271 : vector<1x326xf32>
    %550 = arith.addf %546, %549 : vector<1x326xf32>
    %c11_247 = arith.constant 11 : index
    %551 = memref.load %arg5[%c11_247] : memref<12xf32, #tpu.memory_space<smem>>
    %552 = vector.broadcast %551 : f32 to vector<1x326xf32>
    %553 = arith.addf %550, %552 : vector<1x326xf32>
    %c11_248 = arith.constant 11 : index
    %554 = memref.load %arg5[%c11_248] : memref<12xf32, #tpu.memory_space<smem>>
    %555 = vector.broadcast %554 : f32 to vector<1x326xf32>
    %556 = arith.select %5, %555, %553 : vector<1x326xi1>, vector<1x326xf32>
    %c0_249 = arith.constant 0 : index
    %c11_250 = arith.constant 11 : index
    %c0_251 = arith.constant 0 : index
    %557 = vector.load %arg6[%c0_249, %c11_250, %c0_251] : memref<1x12x326xf32, #tpu.memory_space<vmem>>, vector<1x1x326xf32>
    %558 = vector.shape_cast %557 : vector<1x1x326xf32> to vector<1x326xf32>
    %559 = vector.shape_cast %556 : vector<1x326xf32> to vector<1x1x326xf32>
    tpu.vector_store %arg6[%c0_249, %c11_250, %c0_251], %559 {strides = array<i32>} : memref<1x12x326xf32, #tpu.memory_space<vmem>>, vector<1x1x326xf32>,
    return
  }
  func.func @transform_0(%arg0: i32) -> (i32, i32, i32) {
    %c0_i32 = arith.constant 0 : i32
    %c0_i32_0 = arith.constant 0 : i32
    %c0_i32_1 = arith.constant 0 : i32
    return %arg0, %c0_i32, %c0_i32_0 : i32, i32, i32
  }
  func.func @transform_1(%arg0: i32) -> (i32, i32) {
    %c0_i32 = arith.constant 0 : i32
    %c0_i32_0 = arith.constant 0 : i32
    %c0_i32_1 = arith.constant 0 : i32
    return %c0_i32, %c0_i32_0 : i32, i32
  }
  func.func @transform_2(%arg0: i32) -> i32 {
    %c0_i32 = arith.constant 0 : i32
    %c0_i32_0 = arith.constant 0 : i32
    return %c0_i32 : i32
  }
  func.func @transform_3(%arg0: i32) -> (i32, i32) {
    %c0_i32 = arith.constant 0 : i32
    %c0_i32_0 = arith.constant 0 : i32
    %c0_i32_1 = arith.constant 0 : i32
    return %c0_i32, %c0_i32_0 : i32, i32
  }
  func.func @transform_4(%arg0: i32) -> i32 {
    %c0_i32 = arith.constant 0 : i32
    %c0_i32_0 = arith.constant 0 : i32
    return %c0_i32 : i32
  }
  func.func @transform_5(%arg0: i32) -> (i32, i32, i32) {
    %c0_i32 = arith.constant 0 : i32
    %c0_i32_0 = arith.constant 0 : i32
    %c0_i32_1 = arith.constant 0 : i32
    return %arg0, %c0_i32, %c0_i32_0 : i32, i32, i32
  }
}

</mosaic_0001>

<llo_original>
// kernel: fused_forward.1
$region0: #{fused_forward.1}
  #allocation0 [shape = 'u32[]', space=smem, size = 0x4, offset = 0x4, fixed_abs, tag = 'smem constant byte address 0x4 - core index']
  #allocation1 [shape = 'u32[144,128]{1,0:T(1,128)}', space=vmem, size = 0x12000, scoped, tag = 'internal scratch']
  %s0 = inlined_call_operand.vmem [shape: f32[2,3,326], index: 0, kind: input, shape index: {}]
  %s1 = inlined_call_operand.vmem [shape: f32[4,3], index: 1, kind: input, shape index: {}]
  %s2 = inlined_call_operand.vmem [shape: f32[4], index: 2, kind: input, shape index: {}]
  %s3 = inlined_call_operand.vmem [shape: f32[12,4], index: 3, kind: input, shape index: {}]
  %s4 = inlined_call_operand.vmem [shape: f32[12], index: 4, kind: input, shape index: {}]
  %s5 = inlined_call_operand.vmem [shape: f32[2,12,326], index: 5, kind: output, shape index: {}]
  %s6 = sld [smem:[#allocation0]]
  $region69: #{fused_forward.1} parent=0
    _
  %s8 = ssub.s32 1, %s6
  %s9 = scalar_select 0, %s8, %s6
  $region1: #{fused_forward.1} parent=0
    #allocation2 [shape = 'u8[2048]{0}', space=smem, size = 0x800, scoped, tag = 'input window, operand 1, single buffered']
    #allocation3 [shape = 's32[2]{0}', space=sflag, size = 0x8, scoped, tag = 'scoped memory for fused_forward.1']
    #allocation4 [shape = 'u8[512]{0}', space=smem, size = 0x200, scoped, tag = 'input window, operand 2, single buffered']
    #allocation5 [shape = 's32[1]{0}', space=sflag, size = 0x4, scoped, tag = 'scoped memory for fused_forward.1']
    #allocation6 [shape = 'u8[8192]{0}', space=smem, size = 0x2000, scoped, tag = 'input window, operand 3, single buffered']
    #allocation7 [shape = 'u8[512]{0}', space=smem, size = 0x200, scoped, tag = 'input window, operand 4, single buffered']
    #allocation8 [shape = 's32[1]{0}', space=sflag, size = 0x4, scoped, tag = 'scoped memory for fused_forward.1']
    %10 = vsyncpa [#allocation3], 0
    %11 = vsyncpa [#allocation5], 0
    %12 = vsyncpa [#allocation8], 0
    loop: start=0, step=1, limit=4
    $region2: #{fused_forward.1} parent=1 // loop_pre_header
      _
    $region3: #{fused_forward.1} parent=1 // loop_header
      %s14 = sphi 0, %s18
      %p15 = scmp.ge.s32.totalorder %s14, 4
      %s24 = sphi 0, %s26
      %s27 = sphi 0, %s24
      %s28 = sphi 0, %s27
      %s44 = sphi 0, %s28
      %s48 = sphi 0, %s48
      %s50 = sphi 0, %s48
      %s51 = sphi 0, %s50
      %s65 = sphi 0, %s51
      %s69 = sphi 0, %s69
      %s71 = sphi 0, %s69
      %s72 = sphi 0, %s71
      %s86 = sphi 0, %s72
      %s90 = sphi 0, %s90
      %s92 = sphi 0, %s90
      %s93 = sphi 0, %s92
      %s107 = sphi 0, %s93
      %s111 = sphi 0, %s111
      %s113 = sphi 0, %s111
      %s114 = sphi 0, %s113
      %s128 = sphi 0, %s114
      %s134 = sphi 0, %s136
      %s137 = sphi 0, %s134
      %s138 = sphi 0, %s137
      %s154 = sphi 0, %s138
    $region4: #{fused_forward.1} parent=1 // loop_header_branch
      %17 = sbr.rel (%p15) target = $region8
    $region5: #{fused_forward.1} parent=1 // loop_body
      %s19 = ssub.s32 %s14, 1
      %s20 = ssub.s32 %s14, 2
      %s21 = sadd.s32 %s14, 1
      %s22 = ssub.s32 %s14, %s21
      %p23 = scmp.eq.s32.totalorder %s22, 0
      %s25 = sadd.s32 %s24, 1
      %s26 = scalar_select %p23, %s24, %s25
      %p29 = pneg %p23
      %p30 = scmp.eq.s32.totalorder %s14, 1
      %p31 = por %p29, %p30
      %p32 = scmp.ne.s32.totalorder %s24, %s27
      %p33 = scmp.eq.s32.totalorder %s14, 0
      %p34 = por %p32, %p33
      %p35 = scmp.ne.s32.totalorder %s24, %s27
      %p36 = scmp.eq.s32.totalorder %s19, 1
      %p37 = por %p35, %p36
      %p38 = scmp.ne.s32.totalorder %s27, %s28
      %p39 = scmp.eq.s32.totalorder %s19, 0
      %p40 = por %p38, %p39
      %p41 = scmp.ne.s32.totalorder %s27, %s28
      %p42 = scmp.eq.s32.totalorder %s20, 1
      %p43 = por %p41, %p42
      %p45 = scmp.ne.s32.totalorder %s28, %s44
      %p46 = scmp.eq.s32.totalorder %s20, 0
      %p47 = por %p45, %p46
      %s49 = sadd.s32 %s48, 1
      %p52 = scmp.eq.s32.totalorder %s14, 1
      %p53 = scmp.ne.s32.totalorder %s48, %s50
      %p54 = scmp.eq.s32.totalorder %s14, 0
      %p55 = por %p53, %p54
      %p56 = scmp.ne.s32.totalorder %s48, %s50
      %p57 = scmp.eq.s32.totalorder %s19, 1
      %p58 = por %p56, %p57
      %p59 = scmp.ne.s32.totalorder %s50, %s51
      %p60 = scmp.eq.s32.totalorder %s19, 0
      %p61 = por %p59, %p60
      %p62 = scmp.ne.s32.totalorder %s50, %s51
      %p63 = scmp.eq.s32.totalorder %s20, 1
      %p64 = por %p62, %p63
      %p66 = scmp.ne.s32.totalorder %s51, %s65
      %p67 = scmp.eq.s32.totalorder %s20, 0
      %p68 = por %p66, %p67
      %s70 = sadd.s32 %s69, 1
      %p73 = scmp.eq.s32.totalorder %s14, 1
      %p74 = scmp.ne.s32.totalorder %s69, %s71
      %p75 = scmp.eq.s32.totalorder %s14, 0
      %p76 = por %p74, %p75
      %p77 = scmp.ne.s32.totalorder %s69, %s71
      %p78 = scmp.eq.s32.totalorder %s19, 1
      %p79 = por %p77, %p78
      %p80 = scmp.ne.s32.totalorder %s71, %s72
      %p81 = scmp.eq.s32.totalorder %s19, 0
      %p82 = por %p80, %p81
      %p83 = scmp.ne.s32.totalorder %s71, %s72
      %p84 = scmp.eq.s32.totalorder %s20, 1
      %p85 = por %p83, %p84
      %p87 = scmp.ne.s32.totalorder %s72, %s86
      %p88 = scmp.eq.s32.totalorder %s20, 0
      %p89 = por %p87, %p88
      %s91 = sadd.s32 %s90, 1
      %p94 = scmp.eq.s32.totalorder %s14, 1
      %p95 = scmp.ne.s32.totalorder %s90, %s92
      %p96 = scmp.eq.s32.totalorder %s14, 0
      %p97 = por %p95, %p96
      %p98 = scmp.ne.s32.totalorder %s90, %s92
      %p99 = scmp.eq.s32.totalorder %s19, 1
      %p100 = por %p98, %p99
      %p101 = scmp.ne.s32.totalorder %s92, %s93
      %p102 = scmp.eq.s32.totalorder %s19, 0
      %p103 = por %p101, %p102
      %p104 = scmp.ne.s32.totalorder %s92, %s93
      %p105 = scmp.eq.s32.totalorder %s20, 1
      %p106 = por %p104, %p105
      %p108 = scmp.ne.s32.totalorder %s93, %s107
      %p109 = scmp.eq.s32.totalorder %s20, 0
      %p110 = por %p108, %p109
      %s112 = sadd.s32 %s111, 1
      %p115 = scmp.eq.s32.totalorder %s14, 1
      %p116 = scmp.ne.s32.totalorder %s111, %s113
      %p117 = scmp.eq.s32.totalorder %s14, 0
      %p118 = por %p116, %p117
      %p119 = scmp.ne.s32.totalorder %s111, %s113
      %p120 = scmp.eq.s32.totalorder %s19, 1
      %p121 = por %p119, %p120
      %p122 = scmp.ne.s32.totalorder %s113, %s114
      %p123 = scmp.eq.s32.totalorder %s19, 0
      %p124 = por %p122, %p123
      %p125 = scmp.ne.s32.totalorder %s113, %s114
      %p126 = scmp.eq.s32.totalorder %s20, 1
      %p127 = por %p125, %p126
      %p129 = scmp.ne.s32.totalorder %s114, %s128
      %p130 = scmp.eq.s32.totalorder %s20, 0
      %p131 = por %p129, %p130
      %s132 = ssub.s32 %s14, %s21
      %p133 = scmp.eq.s32.totalorder %s132, 0
      %s135 = sadd.s32 %s134, 1
      %s136 = scalar_select %p133, %s134, %s135
      %p139 = pneg %p133
      %p140 = scmp.eq.s32.totalorder %s14, 1
      %p141 = por %p139, %p140
      %p142 = scmp.ne.s32.totalorder %s134, %s137
      %p143 = scmp.eq.s32.totalorder %s14, 0
      %p144 = por %p142, %p143
      %p145 = scmp.ne.s32.totalorder %s134, %s137
      %p146 = scmp.eq.s32.totalorder %s19, 1
      %p147 = por %p145, %p146
      %p148 = scmp.ne.s32.totalorder %s137, %s138
      %p149 = scmp.eq.s32.totalorder %s19, 0
      %p150 = por %p148, %p149
      %p151 = scmp.ne.s32.totalorder %s137, %s138
      %p152 = scmp.eq.s32.totalorder %s20, 1
      %p153 = por %p151, %p152
      %p155 = scmp.ne.s32.totalorder %s138, %s154
      %p156 = scmp.eq.s32.totalorder %s20, 0
      %p157 = por %p155, %p156
      %p158 = scmp.le.s32.totalorder 1, %s14
      %p159 = scmp.lt.s32.totalorder %s14, 3
      %p160 = pnand %p158, %p159
      %p161 = pneg %p160
      // Predicated region
      $region9: #{fused_forward.1} parent=5 // pred_check
        _
      $region10: #{fused_forward.1} parent=5 // pred_check_branch
        %163 = sbr.rel (%p160) target = $region12
      $region11: #{fused_forward.1} parent=5 // pred_region
        %s164 = ssub.s32 %s14, 1
        // Predicated region
        $region13: #{fused_forward.1} parent=11 // pred_check
          %p165 = pneg %p61
        $region14: #{fused_forward.1} parent=11 // pred_check_branch
          %167 = sbr.rel (%p165) target = $region16
        $region15: #{fused_forward.1} parent=11 // pred_region
          %s169 = ssub.s32 64, 64
          %170 = vsyncadd [#allocation3], %s169
          %s172 = sshll.u32 %s1, 4
          %s173 = int_to_ptr.vmem [resolvable:$true] %s172
          %175 = dma.vmem_to_smem %s173, 64, [#allocation2], [#allocation3]
        $region16: #{fused_forward.1} parent=11 // pred_fallthru
          _
        // Predicated region
        $region17: #{fused_forward.1} parent=11 // pred_check
          %p176 = pneg %p82
        $region18: #{fused_forward.1} parent=11 // pred_check_branch
          %178 = sbr.rel (%p176) target = $region20
        $region19: #{fused_forward.1} parent=11 // pred_region
          %s180 = ssub.s32 16, 16
          %181 = vsyncadd [#allocation5], %s180
          %s183 = sshll.u32 %s2, 4
          %s184 = int_to_ptr.vmem [resolvable:$true] %s183
          %186 = dma.vmem_to_smem %s184, 16, [#allocation4], [#allocation5]
        $region20: #{fused_forward.1} parent=11 // pred_fallthru
          _
        // Predicated region
        $region21: #{fused_forward.1} parent=11 // pred_check
          %p187 = pneg %p103
        $region22: #{fused_forward.1} parent=11 // pred_check_branch
          %189 = sbr.rel (%p187) target = $region24
        $region23: #{fused_forward.1} parent=11 // pred_region
          %s191 = ssub.s32 256, 256
          %192 = vsyncadd [#allocation5], %s191
          %s193 = sshll.u32 %s3, 4
          %s194 = int_to_ptr.vmem [resolvable:$true] %s193
          %199 = dma.vmem_to_smem %s194, 256, [#allocation6], [#allocation5], 128, 128, 8
        $region24: #{fused_forward.1} parent=11 // pred_fallthru
          _
        // Predicated region
        $region25: #{fused_forward.1} parent=11 // pred_check
          %p200 = pneg %p124
        $region26: #{fused_forward.1} parent=11 // pred_check_branch
          %202 = sbr.rel (%p200) target = $region28
        $region27: #{fused_forward.1} parent=11 // pred_region
          %s204 = ssub.s32 16, 16
          %205 = vsyncadd [#allocation8], %s204
          %s207 = sshll.u32 %s4, 4
          %s208 = int_to_ptr.vmem [resolvable:$true] %s207
          %210 = dma.vmem_to_smem %s208, 16, [#allocation7], [#allocation8]
        $region28: #{fused_forward.1} parent=11 // pred_fallthru
          _
      $region12: #{fused_forward.1} parent=5 // pred_fallthru
        _
      %p211 = scmp.lt.s32.totalorder %s14, 2
      // Predicated region
      $region29: #{fused_forward.1} parent=5 // pred_check
        %p212 = pneg %p211
      $region30: #{fused_forward.1} parent=5 // pred_check_branch
        %214 = sbr.rel (%p212) target = $region32
      $region31: #{fused_forward.1} parent=5 // pred_region
        // Predicated region
        $region33: #{fused_forward.1} parent=31 // pred_check
          %p215 = pneg %p34
        $region34: #{fused_forward.1} parent=31 // pred_check_branch
          %217 = sbr.rel (%p215) target = $region36
        $region35: #{fused_forward.1} parent=31 // pred_region
          %p218 = scmp.lt.s32.totalorder %s14, 1
          %s219 = scalar_select %p218, %s14, 1
          %s220 = smul.addr %s219, 3
          %s221 = smul.addr %s220, 4
          %s222 = scalar_lea.vmem %s0, %s221
        $region36: #{fused_forward.1} parent=31 // pred_fallthru
          _
      $region32: #{fused_forward.1} parent=5 // pred_fallthru
        _
      %p223 = scmp.le.s32.totalorder 1, %s14
      %p224 = scmp.lt.s32.totalorder %s14, 3
      %p225 = pnand %p223, %p224
      %p226 = pneg %p225
      // Predicated region
      $region37: #{fused_forward.1} parent=5 // pred_check
        _
      $region38: #{fused_forward.1} parent=5 // pred_check_branch
        %228 = sbr.rel (%p225) target = $region40
      $region39: #{fused_forward.1} parent=5 // pred_region
        %s229 = ssub.s32 %s14, 1
        // Predicated region
        $region41: #{fused_forward.1} parent=39 // pred_check
          %p230 = pneg %p61
        $region42: #{fused_forward.1} parent=39 // pred_check_branch
          %232 = sbr.rel (%p230) target = $region44
        $region43: #{fused_forward.1} parent=39 // pred_region
          %233 = dma.done [#allocation3], 64
        $region44: #{fused_forward.1} parent=39 // pred_fallthru
          _
        // Predicated region
        $region45: #{fused_forward.1} parent=39 // pred_check
          %p234 = pneg %p82
        $region46: #{fused_forward.1} parent=39 // pred_check_branch
          %236 = sbr.rel (%p234) target = $region48
        $region47: #{fused_forward.1} parent=39 // pred_region
          %237 = dma.done [#allocation5], 16
        $region48: #{fused_forward.1} parent=39 // pred_fallthru
          _
        // Predicated region
        $region49: #{fused_forward.1} parent=39 // pred_check
          %p238 = pneg %p103
        $region50: #{fused_forward.1} parent=39 // pred_check_branch
          %240 = sbr.rel (%p238) target = $region52
        $region51: #{fused_forward.1} parent=39 // pred_region
          %241 = dma.done [#allocation5], 256
        $region52: #{fused_forward.1} parent=39 // pred_fallthru
          _
        // Predicated region
        $region53: #{fused_forward.1} parent=39 // pred_check
          %p242 = pneg %p124
        $region54: #{fused_forward.1} parent=39 // pred_check_branch
          %244 = sbr.rel (%p242) target = $region56
        $region55: #{fused_forward.1} parent=39 // pred_region
          %245 = dma.done [#allocation8], 16
        $region56: #{fused_forward.1} parent=39 // pred_fallthru
          _
        %246 = sfence
        %p247 = scmp.lt.s32.totalorder %s19, 1
        %s248 = scalar_select %p247, %s19, 1
        %s249 = smul.addr %s248, 3
        %s250 = smul.addr %s249, 4
        %s251 = scalar_lea.vmem %s0, %s250
        %p252 = pneg %p40
        %p253 = pneg %p37
        %p254 = pneg %p61
        %p255 = pneg %p58
        %p256 = pneg %p82
        %p257 = pneg %p79
        %p258 = pneg %p103
        %p259 = pneg %p100
        %p260 = pneg %p124
        %p261 = pneg %p121
        %p262 = pneg %p150
        %p263 = pneg %p147
        %p264 = scmp.lt.s32.totalorder %s19, 1
        %s265 = scalar_select %p264, %s19, 1
        %s266 = smul.addr %s265, 6
        %s267 = smul.addr %s266, 8
        %s268 = scalar_lea.vmem %s5, %s267
        %p269 = scmp.lt.s32.totalorder %s19, 1
        %s270 = scalar_select %p269, %s19, 1
        %s271 = smul.addr %s270, 3
        %s272 = smul.addr %s271, 4
        %s273 = scalar_lea.vmem %s0, %s272
        %p274 = scmp.lt.s32.totalorder %s19, 1
        %s275 = scalar_select %p274, %s19, 1
        %s276 = smul.addr %s275, 6
        %s277 = smul.addr %s276, 8
        %s278 = scalar_lea.vmem %s5, %s277
        %v279 = vlaneseq
        %v280 = vand.u32 %v279, 127
        %v281 = vadd.s32 %v280, 128
        %v282 = vadd.s32 %v280, 256
        %vm283 = vcmp.eq.s32.totalorder %v280, 0
        %vm284 = vcmp.eq.s32.totalorder %v281, 0
        %vm285 = vcmp.eq.s32.totalorder %v282, 0
        %vm286 = vcmp.eq.s32.totalorder %v280, 325
        %vm287 = vcmp.eq.s32.totalorder %v281, 325
        %vm288 = vcmp.eq.s32.totalorder %v282, 325
        %vm289 = vmor %vm283, %vm286
        %vm290 = vmor %vm284, %vm287
        %vm291 = vmor %vm285, %vm288
        %v292 = vld [vmem:[%s273] ss:$4 sm:$0x7]
        %s293 = scalar_lea.vmem %s273, 1
        %v294 = vld [vmem:[%s293] ss:$4 sm:$0x7]
        %s295 = scalar_lea.vmem %s273, 2
        %v296 = vld [vmem:[%s295] ss:$4 sm:$0x7]
        %s297 = sld [smem:[#allocation2]]
        %v298 = vstv %s297
        %v299 = vmul.f32 %v298, %v292
        %s300 = sld [smem:[#allocation2 + $0x1]]
        %v301 = vstv %s300
        %v302 = vmul.f32 %v301, %v294
        %v303 = vadd.f32 %v299, %v302
        %s304 = sld [smem:[#allocation2 + $0x2]]
        %v305 = vstv %s304
        %v306 = vmul.f32 %v305, %v296
        %v307 = vadd.f32 %v303, %v306
        %s308 = sld [smem:[#allocation4]]
        %v309 = vstv %s308
        %v310 = vadd.f32 %v307, %v309
        %v311 = vmul.f32 %v310, 0.5
        %v312 = vmul.f32 %v310, 0.70710677
        %v313 = vmax.f32 %v312, -4.0
        %v314 = vmin.f32 %v313, 4.0
        %v315 = vmul.f32 %v314, %v314
        %v316 = vmul.f32 %v315, -2.7261424e-10
        %v317 = vadd.f32 %v316, 2.7706815e-08
        %v318 = vmul.f32 %v317, %v315
        %v319 = vadd.f32 %v318, -2.101024e-06
        %v320 = vmul.f32 %v319, %v315
        %v321 = vadd.f32 %v320, -5.6925062e-05
        %v322 = vmul.f32 %v321, %v315
        %v323 = vadd.f32 %v322, -0.00073499064
        %v324 = vmul.f32 %v323, %v315
        %v325 = vadd.f32 %v324, -0.0029546
        %v326 = vmul.f32 %v325, %v315
        %v327 = vadd.f32 %v326, -0.016096033
        %v328 = vmul.f32 %v315, -1.45660715e-05
        %v329 = vadd.f32 %v328, -0.00021337405
        %v330 = vmul.f32 %v329, %v315
        %v331 = vadd.f32 %v330, -0.001682827
        %v332 = vmul.f32 %v331, %v315
        %v333 = vadd.f32 %v332, -0.0073733293
        %v334 = vmul.f32 %v333, %v315
        %v335 = vadd.f32 %v334, -0.014264739
        %v336 = vrcp.pop %v335
        %v337 = vmul.f32 %v335, %v336
        %v338 = vsub.f32 2.0, %v337
        %v339 = vmul.f32 %v336, %v338
        %v340 = vmul.f32 %v314, %v327
        %v341 = vmul.f32 %v340, %v339
        %v342 = vadd.f32 %v341, 1.0
        %v343 = vmul.f32 %v311, %v342
        %s344 = sld [smem:[#allocation2 + $0x80]]
        %v345 = vstv %s344
        %v346 = vmul.f32 %v345, %v292
        %s347 = sld [smem:[#allocation2 + $0x81]]
        %v348 = vstv %s347
        %v349 = vmul.f32 %v348, %v294
        %v350 = vadd.f32 %v346, %v349
        %s351 = sld [smem:[#allocation2 + $0x82]]
        %v352 = vstv %s351
        %v353 = vmul.f32 %v352, %v296
        %v354 = vadd.f32 %v350, %v353
        %s355 = sld [smem:[#allocation4 + $0x1]]
        %v356 = vstv %s355
        %v357 = vadd.f32 %v354, %v356
        %v358 = vmul.f32 %v357, 0.5
        %v359 = vmul.f32 %v357, 0.70710677
        %v360 = vmax.f32 %v359, -4.0
        %v361 = vmin.f32 %v360, 4.0
        %v362 = vmul.f32 %v361, %v361
        %v363 = vmul.f32 %v362, -2.7261424e-10
        %v364 = vadd.f32 %v363, 2.7706815e-08
        %v365 = vmul.f32 %v364, %v362
        %v366 = vadd.f32 %v365, -2.101024e-06
        %v367 = vmul.f32 %v366, %v362
        %v368 = vadd.f32 %v367, -5.6925062e-05
        %v369 = vmul.f32 %v368, %v362
        %v370 = vadd.f32 %v369, -0.00073499064
        %v371 = vmul.f32 %v370, %v362
        %v372 = vadd.f32 %v371, -0.0029546
        %v373 = vmul.f32 %v372, %v362
        %v374 = vadd.f32 %v373, -0.016096033
        %v375 = vmul.f32 %v362, -1.45660715e-05
        %v376 = vadd.f32 %v375, -0.00021337405
        %v377 = vmul.f32 %v376, %v362
        %v378 = vadd.f32 %v377, -0.001682827
        %v379 = vmul.f32 %v378, %v362
        %v380 = vadd.f32 %v379, -0.0073733293
        %v381 = vmul.f32 %v380, %v362
        %v382 = vadd.f32 %v381, -0.014264739
        %v383 = vrcp.pop %v382
        %v384 = vmul.f32 %v382, %v383
        %v385 = vsub.f32 2.0, %v384
        %v386 = vmul.f32 %v383, %v385
        %v387 = vmul.f32 %v361, %v374
        %v388 = vmul.f32 %v387, %v386
        %v389 = vadd.f32 %v388, 1.0
        %v390 = vmul.f32 %v358, %v389
        %s391 = sld [smem:[#allocation2 + $0x100]]
        %v392 = vstv %s391
        %v393 = vmul.f32 %v392, %v292
        %s394 = sld [smem:[#allocation2 + $0x101]]
        %v395 = vstv %s394
        %v396 = vmul.f32 %v395, %v294
        %v397 = vadd.f32 %v393, %v396
        %s398 = sld [smem:[#allocation2 + $0x102]]
        %v399 = vstv %s398
        %v400 = vmul.f32 %v399, %v296
        %v401 = vadd.f32 %v397, %v400
        %s402 = sld [smem:[#allocation4 + $0x2]]
        %v403 = vstv %s402
        %v404 = vadd.f32 %v401, %v403
        %v405 = vmul.f32 %v404, 0.5
        %v406 = vmul.f32 %v404, 0.70710677
        %v407 = vmax.f32 %v406, -4.0
        %v408 = vmin.f32 %v407, 4.0
        %v409 = vmul.f32 %v408, %v408
        %v410 = vmul.f32 %v409, -2.7261424e-10
        %v411 = vadd.f32 %v410, 2.7706815e-08
        %v412 = vmul.f32 %v411, %v409
        %v413 = vadd.f32 %v412, -2.101024e-06
        %v414 = vmul.f32 %v413, %v409
        %v415 = vadd.f32 %v414, -5.6925062e-05
        %v416 = vmul.f32 %v415, %v409
        %v417 = vadd.f32 %v416, -0.00073499064
        %v418 = vmul.f32 %v417, %v409
        %v419 = vadd.f32 %v418, -0.0029546
        %v420 = vmul.f32 %v419, %v409
        %v421 = vadd.f32 %v420, -0.016096033
        %v422 = vmul.f32 %v409, -1.45660715e-05
        %v423 = vadd.f32 %v422, -0.00021337405
        %v424 = vmul.f32 %v423, %v409
        %v425 = vadd.f32 %v424, -0.001682827
        %v426 = vmul.f32 %v425, %v409
        %v427 = vadd.f32 %v426, -0.0073733293
        %v428 = vmul.f32 %v427, %v409
        %v429 = vadd.f32 %v428, -0.014264739
        %v430 = vrcp.pop %v429
        %v431 = vmul.f32 %v429, %v430
        %v432 = vsub.f32 2.0, %v431
        %v433 = vmul.f32 %v430, %v432
        %v434 = vmul.f32 %v408, %v421
        %v435 = vmul.f32 %v434, %v433
        %v436 = vadd.f32 %v435, 1.0
        %v437 = vmul.f32 %v405, %v436
        %s438 = sld [smem:[#allocation2 + $0x180]]
        %v439 = vstv %s438
        %v440 = vmul.f32 %v439, %v292
        %s441 = sld [smem:[#allocation2 + $0x181]]
        %v442 = vstv %s441
        %v443 = vmul.f32 %v442, %v294
        %v444 = vadd.f32 %v440, %v443
        %s445 = sld [smem:[#allocation2 + $0x182]]
        %v446 = vstv %s445
        %v447 = vmul.f32 %v446, %v296
        %v448 = vadd.f32 %v444, %v447
        %s449 = sld [smem:[#allocation4 + $0x3]]
        %v450 = vstv %s449
        %v451 = vadd.f32 %v448, %v450
        %v452 = vmul.f32 %v451, 0.5
        %v453 = vmul.f32 %v451, 0.70710677
        %v454 = vmax.f32 %v453, -4.0
        %v455 = vmin.f32 %v454, 4.0
        %v456 = vmul.f32 %v455, %v455
        %v457 = vmul.f32 %v456, -2.7261424e-10
        %v458 = vadd.f32 %v457, 2.7706815e-08
        %v459 = vmul.f32 %v458, %v456
        %v460 = vadd.f32 %v459, -2.101024e-06
        %v461 = vmul.f32 %v460, %v456
        %v462 = vadd.f32 %v461, -5.6925062e-05
        %v463 = vmul.f32 %v462, %v456
        %v464 = vadd.f32 %v463, -0.00073499064
        %v465 = vmul.f32 %v464, %v456
        %v466 = vadd.f32 %v465, -0.0029546
        %v467 = vmul.f32 %v466, %v456
        %v468 = vadd.f32 %v467, -0.016096033
        %v469 = vmul.f32 %v456, -1.45660715e-05
        %v470 = vadd.f32 %v469, -0.00021337405
        %v471 = vmul.f32 %v470, %v456
        %v472 = vadd.f32 %v471, -0.001682827
        %v473 = vmul.f32 %v472, %v456
        %v474 = vadd.f32 %v473, -0.0073733293
        %v475 = vmul.f32 %v474, %v456
        %v476 = vadd.f32 %v475, -0.014264739
        %v477 = vrcp.pop %v476
        %v478 = vmul.f32 %v476, %v477
        %v479 = vsub.f32 2.0, %v478
        %v480 = vmul.f32 %v477, %v479
        %v481 = vmul.f32 %v455, %v468
        %v482 = vmul.f32 %v481, %v480
        %v483 = vadd.f32 %v482, 1.0
        %v484 = vmul.f32 %v452, %v483
        %s485 = sld [smem:[#allocation6]]
        %v486 = vstv %s485
        %v487 = vmul.f32 %v486, %v343
        %s488 = sld [smem:[#allocation6 + $0x1]]
        %v489 = vstv %s488
        %v490 = vmul.f32 %v489, %v390
        %v491 = vadd.f32 %v487, %v490
        %s492 = sld [smem:[#allocation6 + $0x2]]
        %v493 = vstv %s492
        %v494 = vmul.f32 %v493, %v437
        %v495 = vadd.f32 %v491, %v494
        %s496 = sld [smem:[#allocation6 + $0x3]]
        %v497 = vstv %s496
        %v498 = vmul.f32 %v497, %v484
        %v499 = vadd.f32 %v495, %v498
        %s500 = sld [smem:[#allocation7]]
        %v501 = vstv %s500
        %v502 = vadd.f32 %v499, %v501
        %v504 = vlaneseq
        %v505 = vshrl.u32 %v504, 7
        %v506 = vsub.s32 0, %v505
        %v507 = vrot.slane %v502, %v506
        %v508 = vlaneseq
        %v509 = vshrl.u32 %v508, 7
        %v510 = vsub.s32 1, %v509
        %v511 = vrot.slane %v502, %v510
        %v512 = vlaneseq
        %v513 = vshrl.u32 %v512, 7
        %v514 = vsub.s32 2, %v513
        %v515 = vrot.slane %v502, %v514
        %v519 = vsel %vm289, %v501, %v507
        %v520 = vsel %vm290, %v501, %v511
        %v521 = vsel %vm291, %v501, %v515
        %v525 = vcombine.low %v519, %v520
        %v527 = vunpack.c.l.s4 1966171168
        %v528 = vunpack.c.0.s8 %v527
        %v529 = vlaneseq
        %v530 = vshrl.u32 %v529, 7
        %v531 = vsub.s32 %v528, %v530
        %v532 = vrot.slane %v525, %v531
        %v534 = vunpack.c.l.s4 1966171168
        %v535 = vunpack.c.0.s8 %v534
        %v536 = vlaneseq
        %v537 = vshrl.u32 %v536, 7
        %v538 = vsub.s32 %v535, %v537
        %v539 = vrot.slane %v521, %v538
        %v540 = vcombine.low %v532, %v539
        %v542 = vunpack.c.l.s4 1966171168
        %v543 = vunpack.c.0.s8 %v542
        %v544 = vlaneseq
        %v545 = vshrl.u32 %v544, 7
        %v546 = vsub.s32 %v543, %v545
        %v547 = vrot.slane %v540, %v546
        %v549 = vlaneseq
        %vm550 = vcmp.ge.s32.totalorder %v549, 0
        %vm551 = vcmp.lt.s32.totalorder %v549, 326
        %vm552 = vmand %vm550, %vm551
        %553 = vst.msk [vmem:[%s278] ss:$8 sm:$0x7] %vm552, %v547
        %554 = vst.msk [vmem:[%s278] ss:$8 sm:$0x0] %vm552, %v547
        %s555 = sld [smem:[#allocation6 + $0x80]]
        %v556 = vstv %s555
        %v557 = vmul.f32 %v556, %v343
        %s558 = sld [smem:[#allocation6 + $0x81]]
        %v559 = vstv %s558
        %v560 = vmul.f32 %v559, %v390
        %v561 = vadd.f32 %v557, %v560
        %s562 = sld [smem:[#allocation6 + $0x82]]
        %v563 = vstv %s562
        %v564 = vmul.f32 %v563, %v437
        %v565 = vadd.f32 %v561, %v564
        %s566 = sld [smem:[#allocation6 + $0x83]]
        %v567 = vstv %s566
        %v568 = vmul.f32 %v567, %v484
        %v569 = vadd.f32 %v565, %v568
        %s570 = sld [smem:[#allocation7 + $0x1]]
        %v571 = vstv %s570
        %v572 = vadd.f32 %v569, %v571
        %v574 = vlaneseq
        %v575 = vshrl.u32 %v574, 7
        %v576 = vsub.s32 0, %v575
        %v577 = vrot.slane %v572, %v576
        %v578 = vlaneseq
        %v579 = vshrl.u32 %v578, 7
        %v580 = vsub.s32 1, %v579
        %v581 = vrot.slane %v572, %v580
        %v582 = vlaneseq
        %v583 = vshrl.u32 %v582, 7
        %v584 = vsub.s32 2, %v583
        %v585 = vrot.slane %v572, %v584
        %v589 = vsel %vm289, %v571, %v577
        %v590 = vsel %vm290, %v571, %v581
        %v591 = vsel %vm291, %v571, %v585
        %v595 = vcombine.low %v589, %v590
        %v597 = vunpack.c.l.s4 1966171168
        %v598 = vunpack.c.0.s8 %v597
        %v599 = vlaneseq
        %v600 = vshrl.u32 %v599, 7
        %v601 = vsub.s32 %v598, %v600
        %v602 = vrot.slane %v595, %v601
        %v604 = vunpack.c.l.s4 1966171168
        %v605 = vunpack.c.0.s8 %v604
        %v606 = vlaneseq
        %v607 = vshrl.u32 %v606, 7
        %v608 = vsub.s32 %v605, %v607
        %v609 = vrot.slane %v591, %v608
        %v610 = vcombine.low %v602, %v609
        %v612 = vunpack.c.l.s4 1966171168
        %v613 = vunpack.c.0.s8 %v612
        %v614 = vlaneseq
        %v615 = vshrl.u32 %v614, 7
        %v616 = vsub.s32 %v613, %v615
        %v617 = vrot.slane %v610, %v616
        %s619 = scalar_lea.vmem %s278, 1
        %620 = vst.msk [vmem:[%s619] ss:$8 sm:$0x7] %vm552, %v617
        %621 = vst.msk [vmem:[%s619] ss:$8 sm:$0x0] %vm552, %v617
        %s622 = sld [smem:[#allocation6 + $0x100]]
        %v623 = vstv %s622
        %v624 = vmul.f32 %v623, %v343
        %s625 = sld [smem:[#allocation6 + $0x101]]
        %v626 = vstv %s625
        %v627 = vmul.f32 %v626, %v390
        %v628 = vadd.f32 %v624, %v627
        %s629 = sld [smem:[#allocation6 + $0x102]]
        %v630 = vstv %s629
        %v631 = vmul.f32 %v630, %v437
        %v632 = vadd.f32 %v628, %v631
        %s633 = sld [smem:[#allocation6 + $0x103]]
        %v634 = vstv %s633
        %v635 = vmul.f32 %v634, %v484
        %v636 = vadd.f32 %v632, %v635
        %s637 = sld [smem:[#allocation7 + $0x2]]
        %v638 = vstv %s637
        %v639 = vadd.f32 %v636, %v638
        %v641 = vlaneseq
        %v642 = vshrl.u32 %v641, 7
        %v643 = vsub.s32 0, %v642
        %v644 = vrot.slane %v639, %v643
        %v645 = vlaneseq
        %v646 = vshrl.u32 %v645, 7
        %v647 = vsub.s32 1, %v646
        %v648 = vrot.slane %v639, %v647
        %v649 = vlaneseq
        %v650 = vshrl.u32 %v649, 7
        %v651 = vsub.s32 2, %v650
        %v652 = vrot.slane %v639, %v651
        %v656 = vsel %vm289, %v638, %v644
        %v657 = vsel %vm290, %v638, %v648
        %v658 = vsel %vm291, %v638, %v652
        %v662 = vcombine.low %v656, %v657
        %v664 = vunpack.c.l.s4 1966171168
        %v665 = vunpack.c.0.s8 %v664
        %v666 = vlaneseq
        %v667 = vshrl.u32 %v666, 7
        %v668 = vsub.s32 %v665, %v667
        %v669 = vrot.slane %v662, %v668
        %v671 = vunpack.c.l.s4 1966171168
        %v672 = vunpack.c.0.s8 %v671
        %v673 = vlaneseq
        %v674 = vshrl.u32 %v673, 7
        %v675 = vsub.s32 %v672, %v674
        %v676 = vrot.slane %v658, %v675
        %v677 = vcombine.low %v669, %v676
        %v679 = vunpack.c.l.s4 1966171168
        %v680 = vunpack.c.0.s8 %v679
        %v681 = vlaneseq
        %v682 = vshrl.u32 %v681, 7
        %v683 = vsub.s32 %v680, %v682
        %v684 = vrot.slane %v677, %v683
        %s686 = scalar_lea.vmem %s278, 2
        %687 = vst.msk [vmem:[%s686] ss:$8 sm:$0x7] %vm552, %v684
        %688 = vst.msk [vmem:[%s686] ss:$8 sm:$0x0] %vm552, %v684
        %s689 = sld [smem:[#allocation6 + $0x180]]
        %v690 = vstv %s689
        %v691 = vmul.f32 %v690, %v343
        %s692 = sld [smem:[#allocation6 + $0x181]]
        %v693 = vstv %s692
        %v694 = vmul.f32 %v693, %v390
        %v695 = vadd.f32 %v691, %v694
        %s696 = sld [smem:[#allocation6 + $0x182]]
        %v697 = vstv %s696
        %v698 = vmul.f32 %v697, %v437
        %v699 = vadd.f32 %v695, %v698
        %s700 = sld [smem:[#allocation6 + $0x183]]
        %v701 = vstv %s700
        %v702 = vmul.f32 %v701, %v484
        %v703 = vadd.f32 %v699, %v702
        %s704 = sld [smem:[#allocation7 + $0x3]]
        %v705 = vstv %s704
        %v706 = vadd.f32 %v703, %v705
        %v708 = vlaneseq
        %v709 = vshrl.u32 %v708, 7
        %v710 = vsub.s32 0, %v709
        %v711 = vrot.slane %v706, %v710
        %v712 = vlaneseq
        %v713 = vshrl.u32 %v712, 7
        %v714 = vsub.s32 1, %v713
        %v715 = vrot.slane %v706, %v714
        %v716 = vlaneseq
        %v717 = vshrl.u32 %v716, 7
        %v718 = vsub.s32 2, %v717
        %v719 = vrot.slane %v706, %v718
        %v723 = vsel %vm289, %v705, %v711
        %v724 = vsel %vm290, %v705, %v715
        %v725 = vsel %vm291, %v705, %v719
        %v729 = vcombine.low %v723, %v724
        %v731 = vunpack.c.l.s4 1966171168
        %v732 = vunpack.c.0.s8 %v731
        %v733 = vlaneseq
        %v734 = vshrl.u32 %v733, 7
        %v735 = vsub.s32 %v732, %v734
        %v736 = vrot.slane %v729, %v735
        %v738 = vunpack.c.l.s4 1966171168
        %v739 = vunpack.c.0.s8 %v738
        %v740 = vlaneseq
        %v741 = vshrl.u32 %v740, 7
        %v742 = vsub.s32 %v739, %v741
        %v743 = vrot.slane %v725, %v742
        %v744 = vcombine.low %v736, %v743
        %v746 = vunpack.c.l.s4 1966171168
        %v747 = vunpack.c.0.s8 %v746
        %v748 = vlaneseq
        %v749 = vshrl.u32 %v748, 7
        %v750 = vsub.s32 %v747, %v749
        %v751 = vrot.slane %v744, %v750
        %s753 = scalar_lea.vmem %s278, 3
        %754 = vst.msk [vmem:[%s753] ss:$8 sm:$0x7] %vm552, %v751
        %755 = vst.msk [vmem:[%s753] ss:$8 sm:$0x0] %vm552, %v751
        %s756 = sld [smem:[#allocation6 + $0x200]]
        %v757 = vstv %s756
        %v758 = vmul.f32 %v757, %v343
        %s759 = sld [smem:[#allocation6 + $0x201]]
        %v760 = vstv %s759
        %v761 = vmul.f32 %v760, %v390
        %v762 = vadd.f32 %v758, %v761
        %s763 = sld [smem:[#allocation6 + $0x202]]
        %v764 = vstv %s763
        %v765 = vmul.f32 %v764, %v437
        %v766 = vadd.f32 %v762, %v765
        %s767 = sld [smem:[#allocation6 + $0x203]]
        %v768 = vstv %s767
        %v769 = vmul.f32 %v768, %v484
        %v770 = vadd.f32 %v766, %v769
        %s771 = sld [smem:[#allocation7 + $0x4]]
        %v772 = vstv %s771
        %v773 = vadd.f32 %v770, %v772
        %v775 = vlaneseq
        %v776 = vshrl.u32 %v775, 7
        %v777 = vsub.s32 0, %v776
        %v778 = vrot.slane %v773, %v777
        %v779 = vlaneseq
        %v780 = vshrl.u32 %v779, 7
        %v781 = vsub.s32 1, %v780
        %v782 = vrot.slane %v773, %v781
        %v783 = vlaneseq
        %v784 = vshrl.u32 %v783, 7
        %v785 = vsub.s32 2, %v784
        %v786 = vrot.slane %v773, %v785
        %v790 = vsel %vm289, %v772, %v778
        %v791 = vsel %vm290, %v772, %v782
        %v792 = vsel %vm291, %v772, %v786
        %v796 = vcombine.low %v790, %v791
        %v798 = vunpack.c.l.s4 1966171168
        %v799 = vunpack.c.0.s8 %v798
        %v800 = vlaneseq
        %v801 = vshrl.u32 %v800, 7
        %v802 = vsub.s32 %v799, %v801
        %v803 = vrot.slane %v796, %v802
        %v805 = vunpack.c.l.s4 1966171168
        %v806 = vunpack.c.0.s8 %v805
        %v807 = vlaneseq
        %v808 = vshrl.u32 %v807, 7
        %v809 = vsub.s32 %v806, %v808
        %v810 = vrot.slane %v792, %v809
        %v811 = vcombine.low %v803, %v810
        %v813 = vunpack.c.l.s4 1966171168
        %v814 = vunpack.c.0.s8 %v813
        %v815 = vlaneseq
        %v816 = vshrl.u32 %v815, 7
        %v817 = vsub.s32 %v814, %v816
        %v818 = vrot.slane %v811, %v817
        %s820 = scalar_lea.vmem %s278, 4
        %821 = vst.msk [vmem:[%s820] ss:$8 sm:$0x7] %vm552, %v818
        %822 = vst.msk [vmem:[%s820] ss:$8 sm:$0x0] %vm552, %v818
        %s823 = sld [smem:[#allocation6 + $0x280]]
        %v824 = vstv %s823
        %v825 = vmul.f32 %v824, %v343
        %s826 = sld [smem:[#allocation6 + $0x281]]
        %v827 = vstv %s826
        %v828 = vmul.f32 %v827, %v390
        %v829 = vadd.f32 %v825, %v828
        %s830 = sld [smem:[#allocation6 + $0x282]]
        %v831 = vstv %s830
        %v832 = vmul.f32 %v831, %v437
        %v833 = vadd.f32 %v829, %v832
        %s834 = sld [smem:[#allocation6 + $0x283]]
        %v835 = vstv %s834
        %v836 = vmul.f32 %v835, %v484
        %v837 = vadd.f32 %v833, %v836
        %s838 = sld [smem:[#allocation7 + $0x5]]
        %v839 = vstv %s838
        %v840 = vadd.f32 %v837, %v839
        %v842 = vlaneseq
        %v843 = vshrl.u32 %v842, 7
        %v844 = vsub.s32 0, %v843
        %v845 = vrot.slane %v840, %v844
        %v846 = vlaneseq
        %v847 = vshrl.u32 %v846, 7
        %v848 = vsub.s32 1, %v847
        %v849 = vrot.slane %v840, %v848
        %v850 = vlaneseq
        %v851 = vshrl.u32 %v850, 7
        %v852 = vsub.s32 2, %v851
        %v853 = vrot.slane %v840, %v852
        %v857 = vsel %vm289, %v839, %v845
        %v858 = vsel %vm290, %v839, %v849
        %v859 = vsel %vm291, %v839, %v853
        %v863 = vcombine.low %v857, %v858
        %v865 = vunpack.c.l.s4 1966171168
        %v866 = vunpack.c.0.s8 %v865
        %v867 = vlaneseq
        %v868 = vshrl.u32 %v867, 7
        %v869 = vsub.s32 %v866, %v868
        %v870 = vrot.slane %v863, %v869
        %v872 = vunpack.c.l.s4 1966171168
        %v873 = vunpack.c.0.s8 %v872
        %v874 = vlaneseq
        %v875 = vshrl.u32 %v874, 7
        %v876 = vsub.s32 %v873, %v875
        %v877 = vrot.slane %v859, %v876
        %v878 = vcombine.low %v870, %v877
        %v880 = vunpack.c.l.s4 1966171168
        %v881 = vunpack.c.0.s8 %v880
        %v882 = vlaneseq
        %v883 = vshrl.u32 %v882, 7
        %v884 = vsub.s32 %v881, %v883
        %v885 = vrot.slane %v878, %v884
        %s887 = scalar_lea.vmem %s278, 5
        %888 = vst.msk [vmem:[%s887] ss:$8 sm:$0x7] %vm552, %v885
        %889 = vst.msk [vmem:[%s887] ss:$8 sm:$0x0] %vm552, %v885
        %s890 = sld [smem:[#allocation6 + $0x300]]
        %v891 = vstv %s890
        %v892 = vmul.f32 %v891, %v343
        %s893 = sld [smem:[#allocation6 + $0x301]]
        %v894 = vstv %s893
        %v895 = vmul.f32 %v894, %v390
        %v896 = vadd.f32 %v892, %v895
        %s897 = sld [smem:[#allocation6 + $0x302]]
        %v898 = vstv %s897
        %v899 = vmul.f32 %v898, %v437
        %v900 = vadd.f32 %v896, %v899
        %s901 = sld [smem:[#allocation6 + $0x303]]
        %v902 = vstv %s901
        %v903 = vmul.f32 %v902, %v484
        %v904 = vadd.f32 %v900, %v903
        %s905 = sld [smem:[#allocation7 + $0x6]]
        %v906 = vstv %s905
        %v907 = vadd.f32 %v904, %v906
        %v909 = vlaneseq
        %v910 = vshrl.u32 %v909, 7
        %v911 = vsub.s32 0, %v910
        %v912 = vrot.slane %v907, %v911
        %v913 = vlaneseq
        %v914 = vshrl.u32 %v913, 7
        %v915 = vsub.s32 1, %v914
        %v916 = vrot.slane %v907, %v915
        %v917 = vlaneseq
        %v918 = vshrl.u32 %v917, 7
        %v919 = vsub.s32 2, %v918
        %v920 = vrot.slane %v907, %v919
        %v924 = vsel %vm289, %v906, %v912
        %v925 = vsel %vm290, %v906, %v916
        %v926 = vsel %vm291, %v906, %v920
        %v930 = vcombine.low %v924, %v925
        %v932 = vunpack.c.l.s4 1966171168
        %v933 = vunpack.c.0.s8 %v932
        %v934 = vlaneseq
        %v935 = vshrl.u32 %v934, 7
        %v936 = vsub.s32 %v933, %v935
        %v937 = vrot.slane %v930, %v936
        %v939 = vunpack.c.l.s4 1966171168
        %v940 = vunpack.c.0.s8 %v939
        %v941 = vlaneseq
        %v942 = vshrl.u32 %v941, 7
        %v943 = vsub.s32 %v940, %v942
        %v944 = vrot.slane %v926, %v943
        %v945 = vcombine.low %v937, %v944
        %v947 = vunpack.c.l.s4 1966171168
        %v948 = vunpack.c.0.s8 %v947
        %v949 = vlaneseq
        %v950 = vshrl.u32 %v949, 7
        %v951 = vsub.s32 %v948, %v950
        %v952 = vrot.slane %v945, %v951
        %s954 = scalar_lea.vmem %s278, 6
        %955 = vst.msk [vmem:[%s954] ss:$8 sm:$0x7] %vm552, %v952
        %956 = vst.msk [vmem:[%s954] ss:$8 sm:$0x0] %vm552, %v952
        %s957 = sld [smem:[#allocation6 + $0x380]]
        %v958 = vstv %s957
        %v959 = vmul.f32 %v958, %v343
        %s960 = sld [smem:[#allocation6 + $0x381]]
        %v961 = vstv %s960
        %v962 = vmul.f32 %v961, %v390
        %v963 = vadd.f32 %v959, %v962
        %s964 = sld [smem:[#allocation6 + $0x382]]
        %v965 = vstv %s964
        %v966 = vmul.f32 %v965, %v437
        %v967 = vadd.f32 %v963, %v966
        %s968 = sld [smem:[#allocation6 + $0x383]]
        %v969 = vstv %s968
        %v970 = vmul.f32 %v969, %v484
        %v971 = vadd.f32 %v967, %v970
        %s972 = sld [smem:[#allocation7 + $0x7]]
        %v973 = vstv %s972
        %v974 = vadd.f32 %v971, %v973
        %v976 = vlaneseq
        %v977 = vshrl.u32 %v976, 7
        %v978 = vsub.s32 0, %v977
        %v979 = vrot.slane %v974, %v978
        %v980 = vlaneseq
        %v981 = vshrl.u32 %v980, 7
        %v982 = vsub.s32 1, %v981
        %v983 = vrot.slane %v974, %v982
        %v984 = vlaneseq
        %v985 = vshrl.u32 %v984, 7
        %v986 = vsub.s32 2, %v985
        %v987 = vrot.slane %v974, %v986
        %v991 = vsel %vm289, %v973, %v979
        %v992 = vsel %vm290, %v973, %v983
        %v993 = vsel %vm291, %v973, %v987
        %v997 = vcombine.low %v991, %v992
        %v999 = vunpack.c.l.s4 1966171168
        %v1000 = vunpack.c.0.s8 %v999
        %v1001 = vlaneseq
        %v1002 = vshrl.u32 %v1001, 7
        %v1003 = vsub.s32 %v1000, %v1002
        %v1004 = vrot.slane %v997, %v1003
        %v1006 = vunpack.c.l.s4 1966171168
        %v1007 = vunpack.c.0.s8 %v1006
        %v1008 = vlaneseq
        %v1009 = vshrl.u32 %v1008, 7
        %v1010 = vsub.s32 %v1007, %v1009
        %v1011 = vrot.slane %v993, %v1010
        %v1012 = vcombine.low %v1004, %v1011
        %v1014 = vunpack.c.l.s4 1966171168
        %v1015 = vunpack.c.0.s8 %v1014
        %v1016 = vlaneseq
        %v1017 = vshrl.u32 %v1016, 7
        %v1018 = vsub.s32 %v1015, %v1017
        %v1019 = vrot.slane %v1012, %v1018
        %s1021 = scalar_lea.vmem %s278, 7
        %1022 = vst.msk [vmem:[%s1021] ss:$8 sm:$0x7] %vm552, %v1019
        %1023 = vst.msk [vmem:[%s1021] ss:$8 sm:$0x0] %vm552, %v1019
        %s1024 = sld [smem:[#allocation6 + $0x400]]
        %v1025 = vstv %s1024
        %v1026 = vmul.f32 %v1025, %v343
        %s1027 = sld [smem:[#allocation6 + $0x401]]
        %v1028 = vstv %s1027
        %v1029 = vmul.f32 %v1028, %v390
        %v1030 = vadd.f32 %v1026, %v1029
        %s1031 = sld [smem:[#allocation6 + $0x402]]
        %v1032 = vstv %s1031
        %v1033 = vmul.f32 %v1032, %v437
        %v1034 = vadd.f32 %v1030, %v1033
        %s1035 = sld [smem:[#allocation6 + $0x403]]
        %v1036 = vstv %s1035
        %v1037 = vmul.f32 %v1036, %v484
        %v1038 = vadd.f32 %v1034, %v1037
        %s1039 = sld [smem:[#allocation7 + $0x8]]
        %v1040 = vstv %s1039
        %v1041 = vadd.f32 %v1038, %v1040
        %v1043 = vlaneseq
        %v1044 = vshrl.u32 %v1043, 7
        %v1045 = vsub.s32 0, %v1044
        %v1046 = vrot.slane %v1041, %v1045
        %v1047 = vlaneseq
        %v1048 = vshrl.u32 %v1047, 7
        %v1049 = vsub.s32 1, %v1048
        %v1050 = vrot.slane %v1041, %v1049
        %v1051 = vlaneseq
        %v1052 = vshrl.u32 %v1051, 7
        %v1053 = vsub.s32 2, %v1052
        %v1054 = vrot.slane %v1041, %v1053
        %v1058 = vsel %vm289, %v1040, %v1046
        %v1059 = vsel %vm290, %v1040, %v1050
        %v1060 = vsel %vm291, %v1040, %v1054
        %v1064 = vcombine.low %v1058, %v1059
        %v1066 = vunpack.c.l.s4 1966171168
        %v1067 = vunpack.c.0.s8 %v1066
        %v1068 = vlaneseq
        %v1069 = vshrl.u32 %v1068, 7
        %v1070 = vsub.s32 %v1067, %v1069
        %v1071 = vrot.slane %v1064, %v1070
        %v1073 = vunpack.c.l.s4 1966171168
        %v1074 = vunpack.c.0.s8 %v1073
        %v1075 = vlaneseq
        %v1076 = vshrl.u32 %v1075, 7
        %v1077 = vsub.s32 %v1074, %v1076
        %v1078 = vrot.slane %v1060, %v1077
        %v1079 = vcombine.low %v1071, %v1078
        %v1081 = vunpack.c.l.s4 1966171168
        %v1082 = vunpack.c.0.s8 %v1081
        %v1083 = vlaneseq
        %v1084 = vshrl.u32 %v1083, 7
        %v1085 = vsub.s32 %v1082, %v1084
        %v1086 = vrot.slane %v1079, %v1085
        %s1088 = scalar_lea.vmem %s278, 24
        %1089 = vst.msk [vmem:[%s1088] ss:$8 sm:$0x7] %vm552, %v1086
        %1090 = vst.msk [vmem:[%s1088] ss:$8 sm:$0x0] %vm552, %v1086
        %s1091 = sld [smem:[#allocation6 + $0x480]]
        %v1092 = vstv %s1091
        %v1093 = vmul.f32 %v1092, %v343
        %s1094 = sld [smem:[#allocation6 + $0x481]]
        %v1095 = vstv %s1094
        %v1096 = vmul.f32 %v1095, %v390
        %v1097 = vadd.f32 %v1093, %v1096
        %s1098 = sld [smem:[#allocation6 + $0x482]]
        %v1099 = vstv %s1098
        %v1100 = vmul.f32 %v1099, %v437
        %v1101 = vadd.f32 %v1097, %v1100
        %s1102 = sld [smem:[#allocation6 + $0x483]]
        %v1103 = vstv %s1102
        %v1104 = vmul.f32 %v1103, %v484
        %v1105 = vadd.f32 %v1101, %v1104
        %s1106 = sld [smem:[#allocation7 + $0x9]]
        %v1107 = vstv %s1106
        %v1108 = vadd.f32 %v1105, %v1107
        %v1110 = vlaneseq
        %v1111 = vshrl.u32 %v1110, 7
        %v1112 = vsub.s32 0, %v1111
        %v1113 = vrot.slane %v1108, %v1112
        %v1114 = vlaneseq
        %v1115 = vshrl.u32 %v1114, 7
        %v1116 = vsub.s32 1, %v1115
        %v1117 = vrot.slane %v1108, %v1116
        %v1118 = vlaneseq
        %v1119 = vshrl.u32 %v1118, 7
        %v1120 = vsub.s32 2, %v1119
        %v1121 = vrot.slane %v1108, %v1120
        %v1125 = vsel %vm289, %v1107, %v1113
        %v1126 = vsel %vm290, %v1107, %v1117
        %v1127 = vsel %vm291, %v1107, %v1121
        %v1131 = vcombine.low %v1125, %v1126
        %v1133 = vunpack.c.l.s4 1966171168
        %v1134 = vunpack.c.0.s8 %v1133
        %v1135 = vlaneseq
        %v1136 = vshrl.u32 %v1135, 7
        %v1137 = vsub.s32 %v1134, %v1136
        %v1138 = vrot.slane %v1131, %v1137
        %v1140 = vunpack.c.l.s4 1966171168
        %v1141 = vunpack.c.0.s8 %v1140
        %v1142 = vlaneseq
        %v1143 = vshrl.u32 %v1142, 7
        %v1144 = vsub.s32 %v1141, %v1143
        %v1145 = vrot.slane %v1127, %v1144
        %v1146 = vcombine.low %v1138, %v1145
        %v1148 = vunpack.c.l.s4 1966171168
        %v1149 = vunpack.c.0.s8 %v1148
        %v1150 = vlaneseq
        %v1151 = vshrl.u32 %v1150, 7
        %v1152 = vsub.s32 %v1149, %v1151
        %v1153 = vrot.slane %v1146, %v1152
        %s1155 = scalar_lea.vmem %s278, 25
        %1156 = vst.msk [vmem:[%s1155] ss:$8 sm:$0x7] %vm552, %v1153
        %1157 = vst.msk [vmem:[%s1155] ss:$8 sm:$0x0] %vm552, %v1153
        %s1158 = sld [smem:[#allocation6 + $0x500]]
        %v1159 = vstv %s1158
        %v1160 = vmul.f32 %v1159, %v343
        %s1161 = sld [smem:[#allocation6 + $0x501]]
        %v1162 = vstv %s1161
        %v1163 = vmul.f32 %v1162, %v390
        %v1164 = vadd.f32 %v1160, %v1163
        %s1165 = sld [smem:[#allocation6 + $0x502]]
        %v1166 = vstv %s1165
        %v1167 = vmul.f32 %v1166, %v437
        %v1168 = vadd.f32 %v1164, %v1167
        %s1169 = sld [smem:[#allocation6 + $0x503]]
        %v1170 = vstv %s1169
        %v1171 = vmul.f32 %v1170, %v484
        %v1172 = vadd.f32 %v1168, %v1171
        %s1173 = sld [smem:[#allocation7 + $0xa]]
        %v1174 = vstv %s1173
        %v1175 = vadd.f32 %v1172, %v1174
        %v1177 = vlaneseq
        %v1178 = vshrl.u32 %v1177, 7
        %v1179 = vsub.s32 0, %v1178
        %v1180 = vrot.slane %v1175, %v1179
        %v1181 = vlaneseq
        %v1182 = vshrl.u32 %v1181, 7
        %v1183 = vsub.s32 1, %v1182
        %v1184 = vrot.slane %v1175, %v1183
        %v1185 = vlaneseq
        %v1186 = vshrl.u32 %v1185, 7
        %v1187 = vsub.s32 2, %v1186
        %v1188 = vrot.slane %v1175, %v1187
        %v1192 = vsel %vm289, %v1174, %v1180
        %v1193 = vsel %vm290, %v1174, %v1184
        %v1194 = vsel %vm291, %v1174, %v1188
        %v1198 = vcombine.low %v1192, %v1193
        %v1200 = vunpack.c.l.s4 1966171168
        %v1201 = vunpack.c.0.s8 %v1200
        %v1202 = vlaneseq
        %v1203 = vshrl.u32 %v1202, 7
        %v1204 = vsub.s32 %v1201, %v1203
        %v1205 = vrot.slane %v1198, %v1204
        %v1207 = vunpack.c.l.s4 1966171168
        %v1208 = vunpack.c.0.s8 %v1207
        %v1209 = vlaneseq
        %v1210 = vshrl.u32 %v1209, 7
        %v1211 = vsub.s32 %v1208, %v1210
        %v1212 = vrot.slane %v1194, %v1211
        %v1213 = vcombine.low %v1205, %v1212
        %v1215 = vunpack.c.l.s4 1966171168
        %v1216 = vunpack.c.0.s8 %v1215
        %v1217 = vlaneseq
        %v1218 = vshrl.u32 %v1217, 7
        %v1219 = vsub.s32 %v1216, %v1218
        %v1220 = vrot.slane %v1213, %v1219
        %s1222 = scalar_lea.vmem %s278, 26
        %1223 = vst.msk [vmem:[%s1222] ss:$8 sm:$0x7] %vm552, %v1220
        %1224 = vst.msk [vmem:[%s1222] ss:$8 sm:$0x0] %vm552, %v1220
        %s1225 = sld [smem:[#allocation6 + $0x580]]
        %v1226 = vstv %s1225
        %v1227 = vmul.f32 %v1226, %v343
        %s1228 = sld [smem:[#allocation6 + $0x581]]
        %v1229 = vstv %s1228
        %v1230 = vmul.f32 %v1229, %v390
        %v1231 = vadd.f32 %v1227, %v1230
        %s1232 = sld [smem:[#allocation6 + $0x582]]
        %v1233 = vstv %s1232
        %v1234 = vmul.f32 %v1233, %v437
        %v1235 = vadd.f32 %v1231, %v1234
        %s1236 = sld [smem:[#allocation6 + $0x583]]
        %v1237 = vstv %s1236
        %v1238 = vmul.f32 %v1237, %v484
        %v1239 = vadd.f32 %v1235, %v1238
        %s1240 = sld [smem:[#allocation7 + $0xb]]
        %v1241 = vstv %s1240
        %v1242 = vadd.f32 %v1239, %v1241
        %v1244 = vlaneseq
        %v1245 = vshrl.u32 %v1244, 7
        %v1246 = vsub.s32 0, %v1245
        %v1247 = vrot.slane %v1242, %v1246
        %v1248 = vlaneseq
        %v1249 = vshrl.u32 %v1248, 7
        %v1250 = vsub.s32 1, %v1249
        %v1251 = vrot.slane %v1242, %v1250
        %v1252 = vlaneseq
        %v1253 = vshrl.u32 %v1252, 7
        %v1254 = vsub.s32 2, %v1253
        %v1255 = vrot.slane %v1242, %v1254
        %v1259 = vsel %vm289, %v1241, %v1247
        %v1260 = vsel %vm290, %v1241, %v1251
        %v1261 = vsel %vm291, %v1241, %v1255
        %v1265 = vcombine.low %v1259, %v1260
        %v1267 = vunpack.c.l.s4 1966171168
        %v1268 = vunpack.c.0.s8 %v1267
        %v1269 = vlaneseq
        %v1270 = vshrl.u32 %v1269, 7
        %v1271 = vsub.s32 %v1268, %v1270
        %v1272 = vrot.slane %v1265, %v1271
        %v1274 = vunpack.c.l.s4 1966171168
        %v1275 = vunpack.c.0.s8 %v1274
        %v1276 = vlaneseq
        %v1277 = vshrl.u32 %v1276, 7
        %v1278 = vsub.s32 %v1275, %v1277
        %v1279 = vrot.slane %v1261, %v1278
        %v1280 = vcombine.low %v1272, %v1279
        %v1282 = vunpack.c.l.s4 1966171168
        %v1283 = vunpack.c.0.s8 %v1282
        %v1284 = vlaneseq
        %v1285 = vshrl.u32 %v1284, 7
        %v1286 = vsub.s32 %v1283, %v1285
        %v1287 = vrot.slane %v1280, %v1286
        %s1289 = scalar_lea.vmem %s278, 27
        %1290 = vst.msk [vmem:[%s1289] ss:$8 sm:$0x7] %vm552, %v1287
        %1291 = vst.msk [vmem:[%s1289] ss:$8 sm:$0x0] %vm552, %v1287
        %p1292 = scmp.lt.s32.totalorder %s19, 1
        %s1293 = scalar_select %p1292, %s19, 1
        %s1294 = smul.addr %s1293, 6
        %s1295 = smul.addr %s1294, 8
        %s1296 = scalar_lea.vmem %s5, %s1295
        // Predicated region
        $region57: #{fused_forward.1} parent=39 // pred_check
          %p1297 = pneg %p147
        $region58: #{fused_forward.1} parent=39 // pred_check_branch
          %1299 = sbr.rel (%p1297) target = $region60
        $region59: #{fused_forward.1} parent=39 // pred_region
          _
        $region60: #{fused_forward.1} parent=39 // pred_fallthru
          _
      $region40: #{fused_forward.1} parent=5 // pred_fallthru
        _
      %p1300 = scmp.le.s32.totalorder 2, %s14
      // Predicated region
      $region61: #{fused_forward.1} parent=5 // pred_check
        %p1301 = pneg %p1300
      $region62: #{fused_forward.1} parent=5 // pred_check_branch
        %1303 = sbr.rel (%p1301) target = $region64
      $region63: #{fused_forward.1} parent=5 // pred_region
        %s1304 = ssub.s32 %s14, 2
        // Predicated region
        $region65: #{fused_forward.1} parent=63 // pred_check
          %p1305 = pneg %p153
        $region66: #{fused_forward.1} parent=63 // pred_check_branch
          %1307 = sbr.rel (%p1305) target = $region68
        $region67: #{fused_forward.1} parent=63 // pred_region
          %p1308 = scmp.lt.s32.totalorder %s20, 1
          %s1309 = scalar_select %p1308, %s20, 1
          %s1310 = smul.addr %s1309, 6
          %s1311 = smul.addr %s1310, 8
          %s1312 = scalar_lea.vmem %s5, %s1311
        $region68: #{fused_forward.1} parent=63 // pred_fallthru
          _
      $region64: #{fused_forward.1} parent=5 // pred_fallthru
        _
    $region6: #{fused_forward.1} parent=1 // loop_footer
      %s18 = sadd.s32 1, %s14
    $region7: #{fused_forward.1} parent=1 // loop_footer_branch
      %13 = sbr.rel target = $region3
    $region8: #{fused_forward.1} parent=1 // loop_exit
      _
    %1313 = vsyncpa [#allocation3], 1
    %s1314 = scalar_lea.sflag [#allocation3], 1
    %1315 = vsyncpa %s1314, 1
    %1316 = vsyncpa [#allocation5], 1
    %1317 = vsyncpa [#allocation8], 1

</llo_original>
